<compile_context>
chip_gen: v6e
topology: v6e:2x2x1
jax: 0.10.0
libtpu: 0.0.40
codegen_flags: <defaults>
</compile_context>

<pallas_src>
import collections

import jax
import jax.numpy as jnp
from jax.experimental import pallas as pl
from jax.experimental.pallas import tpu as pltpu


# --------------------------------------------------------------------------
# Kernel: whole 3-layer MLP for one batch tile. Weights arrive pre-transposed
# as (in, out) and already in the matmul compute dtype; biases stay f32.
# --------------------------------------------------------------------------
def blnn_kernel(x_ref, w1_ref, b1_ref, w2_ref, b2_ref, wout_ref, o_ref):
    cdt = w1_ref.dtype  # matmul input dtype (f32 or bf16); accumulation is f32

    # hidden layer 1: tanh(x @ W1 + b1)   (f32 accumulate, f32 bias/tanh)
    h = jnp.tanh(
        jnp.dot(x_ref[...], w1_ref[...], preferred_element_type=jnp.float32)
        + b1_ref[...]
    )
    # hidden layer 2: tanh(h @ W2 + b2)
    h = jnp.tanh(
        jnp.dot(h.astype(cdt), w2_ref[...], preferred_element_type=jnp.float32)
        + b2_ref[...]
    )
    # output layer (no bias): h @ Wout
    o_ref[...] = jnp.dot(
        h.astype(cdt), wout_ref[...], preferred_element_type=jnp.float32
    ).astype(o_ref.dtype)


def _round_up(n, m):
    return ((n + m - 1) // m) * m


def _vmem_capacity_bytes():
    try:
        return int(pltpu.get_tpu_info().vmem_capacity_bytes)
    except Exception:
        return 64 * 1024 * 1024  # conservative: v7x per-TensorCore VMEM


# --------------------------------------------------------------------------
# One-time parameter preparation (hoisted out of the per-call forward path):
# torch (out, in) weights -> padded (in, out) layout in the compute dtype,
# biases -> (1, out_p) f32.  Only output/lane dims are padded to 128.
# --------------------------------------------------------------------------
PreparedBLNN = collections.namedtuple(
    "PreparedBLNN",
    ["w1", "b1", "w2", "b2", "wout",
     "d_in", "d_out", "d_h1_p", "d_h2_p", "d_out_p", "compute_dtype"],
)


def prepare_params(params, compute_dtype=jnp.bfloat16):
    w1, b1, w2, b2, wout = params
    d_in, d_h1, d_h2, d_out = w1.shape[1], w1.shape[0], w2.shape[0], wout.shape[0]
    d_h1_p = _round_up(d_h1, 128)
    d_h2_p = _round_up(d_h2, 128)
    d_out_p = _round_up(d_out, 128)
    cdt = jnp.dtype(compute_dtype)

    def prep_w(w, in_dim, out_p):  # torch (out, in) -> padded (in, out), cast once
        wp = jnp.zeros((in_dim, out_p), cdt)
        return wp.at[: w.shape[1], : w.shape[0]].set(w.T.astype(cdt))

    def prep_b(b, out_p):  # (d,) -> (1, out_p) f32
        bp = jnp.zeros((1, out_p), jnp.float32)
        return bp.at[0, : b.shape[0]].set(b.astype(jnp.float32))

    return PreparedBLNN(
        w1=prep_w(w1, d_in, d_h1_p), b1=prep_b(b1, d_h1_p),
        w2=prep_w(w2, d_h1_p, d_h2_p), b2=prep_b(b2, d_h2_p),
        wout=prep_w(wout, d_h2_p, d_out_p),
        d_in=d_in, d_out=d_out,
        d_h1_p=d_h1_p, d_h2_p=d_h2_p, d_out_p=d_out_p,
        compute_dtype=cdt,
    )


# --------------------------------------------------------------------------
# pallas_call builder (cached per static configuration).
# --------------------------------------------------------------------------
_CALL_CACHE = {}


def _build_call(B_p, block_b, d_in, d_h1_p, d_h2_p, d_out_p,
                compute_dtype, out_dtype, single_buffer):
    c_item = jnp.dtype(compute_dtype).itemsize
    o_item = jnp.dtype(out_dtype).itemsize
    grid = (B_p // block_b,)

    # VMEM budget: resident weights (single-buffered when supported) plus
    # double-buffered streamed x / output tiles, with headroom for Mosaic
    # internal scratch; capped at ~85% of physical VMEM (generation-aware).
    param_bufs = 1 if single_buffer else 2
    resident = (d_in * d_h1_p + d_h1_p * d_h2_p + d_h2_p * d_out_p) * c_item \
               + (d_h1_p + d_h2_p) * 4
    streamed = block_b * (d_in * c_item + d_out_p * o_item)
    vmem_need = param_bufs * resident + 2 * streamed
    cap = _vmem_capacity_bytes()
    vmem_limit = int(min(max(int(1.25 * vmem_need) + (4 << 20), 32 << 20),
                         int(0.85 * cap)))

    pkw = dict(pipeline_mode=pl.Buffered(1)) if single_buffer else {}
    full = lambda i: (0, 0)  # grid-invariant parameter blocks

    cost = pl.CostEstimate(
        flops=2 * B_p * (d_in * d_h1_p + d_h1_p * d_h2_p + d_h2_p * d_out_p),
        transcendentals=B_p * (d_h1_p + d_h2_p),
        bytes_accessed=int(B_p * d_in * c_item + resident + B_p * d_out_p * o_item),
    )

    call = pl.pallas_call(
        blnn_kernel,
        out_shape=jax.ShapeDtypeStruct((B_p, d_out_p), out_dtype),
        grid=grid,
        in_specs=[
            pl.BlockSpec((block_b, d_in), lambda i: (i, 0)),   # x tile (K un-padded)
            pl.BlockSpec((d_in, d_h1_p), full, **pkw),         # W1 (in,out)
            pl.BlockSpec((1, d_h1_p), full, **pkw),            # b1
            pl.BlockSpec((d_h1_p, d_h2_p), full, **pkw),       # W2 (in,out)
            pl.BlockSpec((1, d_h2_p), full, **pkw),            # b2
            pl.BlockSpec((d_h2_p, d_out_p), full, **pkw),      # Wout (in,out)
        ],
        out_specs=pl.BlockSpec((block_b, d_out_p), lambda i: (i, 0)),
        compiler_params=pltpu.CompilerParams(
            dimension_semantics=("parallel",),
            vmem_limit_bytes=vmem_limit,
        ),
        cost_estimate=cost,
    )
    return jax.jit(call)


# --------------------------------------------------------------------------
# Per-call forward: pad batch / cast x, launch the cached kernel, slice out.
# --------------------------------------------------------------------------
def blnn_forward(x, prepared, *, block_b=512, out_dtype=jnp.float32):
    """x: (B, d_in); prepared: PreparedBLNN from prepare_params()."""
    p = prepared
    B = x.shape[0]

    # Big batch tile (fewer grid steps), but keep the grid >= 2 when B allows
    # so both v7x TensorCores get work via the "parallel" axis.
    bb = _round_up(max(8, min(block_b, B)), 8)
    if B > 8:
        bb = min(bb, _round_up(pl.cdiv(B, 2), 8))
    B_p = _round_up(B, bb)

    x_c = x.astype(p.compute_dtype)
    if B_p != B:
        x_c = jnp.zeros((B_p, p.d_in), p.compute_dtype).at[:B].set(x_c)

    base_key = (B_p, bb, p.d_in, p.d_h1_p, p.d_h2_p, p.d_out_p,
                str(p.compute_dtype), str(jnp.dtype(out_dtype)))
    args = (x_c, p.w1, p.b1, p.w2, p.b2, p.wout)

    out_p = None
    for single_buffer in (True, False):
        key = base_key + (single_buffer,)
        try:
            call = _CALL_CACHE.get(key)
            if call is None:
                call = _build_call(B_p, bb, p.d_in, p.d_h1_p, p.d_h2_p, p.d_out_p,
                                   p.compute_dtype, out_dtype, single_buffer)
            out_p = call(*args)
            _CALL_CACHE[key] = call
            break
        except Exception:
            if not single_buffer:
                raise  # double-buffered fallback also failed -> real error

    return out_p[:B, : p.d_out]


# --------------------------------------------------------------------------
# Parameter init mirroring BLNN.__init__: orthogonal weights (torch
# orthogonal_), biases ~ U(-1/sqrt(fan_in), 1/sqrt(fan_in)) like torch Linear.
# --------------------------------------------------------------------------
def init_blnn_params(key, d_in, d_hidden, d_out):
    orth = jax.nn.initializers.orthogonal()
    k1, k2, k3, kb1, kb2 = jax.random.split(key, 5)
    w1 = orth(k1, (d_hidden[0], d_in), jnp.float32)          # torch (out, in)
    b1 = jax.random.uniform(kb1, (d_hidden[0],), jnp.float32,
                            -1.0 / d_in ** 0.5, 1.0 / d_in ** 0.5)
    w2 = orth(k2, (d_hidden[1], d_hidden[0]), jnp.float32)
    b2 = jax.random.uniform(kb2, (d_hidden[1],), jnp.float32,
                            -1.0 / d_hidden[0] ** 0.5, 1.0 / d_hidden[0] ** 0.5)
    wout = orth(k3, (d_out, d_hidden[1]), jnp.float32)        # last_layer: bias=None
    return (w1, b1, w2, b2, wout)


def blnn_reference(x, params):
    """Pure-JAX f32 reference of the PyTorch forward for verification."""
    w1, b1, w2, b2, wout = params
    h = jnp.tanh(x @ w1.T + b1[None, :])
    h = jnp.tanh(h @ w2.T + b2[None, :])
    return h @ wout.T


if __name__ == "__main__":
    # Small shapes consistent with BLNN(d_in=4, d_hidden=[32, 32], d_out=4, 'Tanh').
    B, d_in, d_hidden, d_out = 64, 4, [32, 32], 4

    key = jax.random.PRNGKey(0)
    kx, kp = jax.random.split(key)
    x = jax.random.normal(kx, (B, d_in), dtype=jnp.float32)
    params = init_blnn_params(kp, d_in, d_hidden, d_out)

    ref = blnn_reference(x, params)

    # Default path: bf16 matmul inputs, f32 accumulation + f32 bias/tanh.
    prep_bf16 = prepare_params(params)  # one-time weight transpose/pad/cast
    out_bf16 = jax.block_until_ready(blnn_forward(x, prep_bf16))
    assert out_bf16.shape == (B, d_out)
    assert jnp.allclose(out_bf16, ref, atol=5e-2, rtol=5e-2), "bf16 mismatch vs reference"

    # Full-f32 matmul path: must match the reference tightly.
    prep_f32 = prepare_params(params, compute_dtype=jnp.float32)
    out_f32 = jax.block_until_ready(blnn_forward(x, prep_f32))
    assert out_f32.shape == (B, d_out)
    assert jnp.allclose(out_f32, ref, atol=1e-5, rtol=1e-5), "f32 mismatch vs reference"

    print("KERNEL_OK")
</pallas_src>

<mosaic_0001>
module attributes {stable_mosaic.version = 11 : i64} {
  func.func @blnn_kernel(%arg0: i32, %arg1: memref<32x4xbf16, #tpu.memory_space<vmem>>, %arg2: memref<4x128xbf16, #tpu.memory_space<vmem>>, %arg3: memref<1x128xf32, #tpu.memory_space<vmem>>, %arg4: memref<128x128xbf16, #tpu.memory_space<vmem>>, %arg5: memref<1x128xf32, #tpu.memory_space<vmem>>, %arg6: memref<128x128xbf16, #tpu.memory_space<vmem>>, %arg7: memref<32x128xf32, #tpu.memory_space<vmem>>) attributes {dimension_semantics = [#tpu.dimension_semantics<parallel>], iteration_bounds = array<i64: 2>, scalar_prefetch = 0 : i64, scratch_operands = 0 : i64, tpu.core_type = #tpu.core_type<tc>, window_params = [{transform_indices = @transform_0, window_bounds = array<i64: 32, 4>}, {pipeline_mode = #tpu.pipeline_mode<synchronous>, transform_indices = @transform_1, window_bounds = array<i64: 4, 128>}, {pipeline_mode = #tpu.pipeline_mode<synchronous>, transform_indices = @transform_2, window_bounds = array<i64: 1, 128>}, {pipeline_mode = #tpu.pipeline_mode<synchronous>, transform_indices = @transform_3, window_bounds = array<i64: 128, 128>}, {pipeline_mode = #tpu.pipeline_mode<synchronous>, transform_indices = @transform_4, window_bounds = array<i64: 1, 128>}, {pipeline_mode = #tpu.pipeline_mode<synchronous>, transform_indices = @transform_5, window_bounds = array<i64: 128, 128>}, {transform_indices = @transform_6, window_bounds = array<i64: 32, 128>}]} {
    %c0 = arith.constant 0 : index
    %c0_0 = arith.constant 0 : index
    %0 = vector.load %arg1[%c0, %c0_0] : memref<32x4xbf16, #tpu.memory_space<vmem>>, vector<32x4xbf16>
    %c0_1 = arith.constant 0 : index
    %c0_2 = arith.constant 0 : index
    %1 = vector.load %arg2[%c0_1, %c0_2] : memref<4x128xbf16, #tpu.memory_space<vmem>>, vector<4x128xbf16>
    %cst = arith.constant dense<0.000000e+00> : vector<32x128xf32>
    %2 = tpu.matmul %0, %1, %cst {dimension_numbers = #tpu.dot_dimension_numbers<[1], [0], [0], [1], [0, 0, 1, 1], [], []>} : vector<32x4xbf16>, vector<4x128xbf16>, vector<32x128xf32> -> vector<32x128xf32>
    %c0_3 = arith.constant 0 : index
    %c0_4 = arith.constant 0 : index
    %3 = vector.load %arg3[%c0_3, %c0_4] : memref<1x128xf32, #tpu.memory_space<vmem>>, vector<1x128xf32>
    %4 = vector.broadcast %3 : vector<1x128xf32> to vector<32x128xf32>
    %5 = arith.addf %2, %4 : vector<32x128xf32>
    %6 = math.tanh %5 : vector<32x128xf32>
    %7 = arith.truncf %6 : vector<32x128xf32> to vector<32x128xbf16>
    %c0_5 = arith.constant 0 : index
    %c0_6 = arith.constant 0 : index
    %8 = vector.load %arg4[%c0_5, %c0_6] : memref<128x128xbf16, #tpu.memory_space<vmem>>, vector<128x128xbf16>
    %cst_7 = arith.constant dense<0.000000e+00> : vector<32x128xf32>
    %9 = tpu.matmul %7, %8, %cst_7 {dimension_numbers = #tpu.dot_dimension_numbers<[1], [0], [0], [1], [0, 0, 1, 1], [], []>} : vector<32x128xbf16>, vector<128x128xbf16>, vector<32x128xf32> -> vector<32x128xf32>
    %c0_8 = arith.constant 0 : index
    %c0_9 = arith.constant 0 : index
    %10 = vector.load %arg5[%c0_8, %c0_9] : memref<1x128xf32, #tpu.memory_space<vmem>>, vector<1x128xf32>
    %11 = vector.broadcast %10 : vector<1x128xf32> to vector<32x128xf32>
    %12 = arith.addf %9, %11 : vector<32x128xf32>
    %13 = math.tanh %12 : vector<32x128xf32>
    %14 = arith.truncf %13 : vector<32x128xf32> to vector<32x128xbf16>
    %c0_10 = arith.constant 0 : index
    %c0_11 = arith.constant 0 : index
    %15 = vector.load %arg6[%c0_10, %c0_11] : memref<128x128xbf16, #tpu.memory_space<vmem>>, vector<128x128xbf16>
    %cst_12 = arith.constant dense<0.000000e+00> : vector<32x128xf32>
    %16 = tpu.matmul %14, %15, %cst_12 {dimension_numbers = #tpu.dot_dimension_numbers<[1], [0], [0], [1], [0, 0, 1, 1], [], []>} : vector<32x128xbf16>, vector<128x128xbf16>, vector<32x128xf32> -> vector<32x128xf32>
    %c0_13 = arith.constant 0 : index
    %c0_14 = arith.constant 0 : index
    %17 = vector.load %arg7[%c0_13, %c0_14] : memref<32x128xf32, #tpu.memory_space<vmem>>, vector<32x128xf32>
    tpu.vector_store %arg7[%c0_13, %c0_14], %16 {strides = array<i32>} : memref<32x128xf32, #tpu.memory_space<vmem>>, vector<32x128xf32>,
    return
  }
  func.func @transform_0(%arg0: i32) -> (i32, i32) {
    %c0_i32 = arith.constant 0 : i32
    %c0_i32_0 = arith.constant 0 : i32
    return %arg0, %c0_i32 : i32, i32
  }
  func.func @transform_1(%arg0: i32) -> (i32, i32) {
    %c0_i32 = arith.constant 0 : i32
    %c0_i32_0 = arith.constant 0 : i32
    %c0_i32_1 = arith.constant 0 : i32
    return %c0_i32, %c0_i32_0 : i32, i32
  }
  func.func @transform_2(%arg0: i32) -> (i32, i32) {
    %c0_i32 = arith.constant 0 : i32
    %c0_i32_0 = arith.constant 0 : i32
    %c0_i32_1 = arith.constant 0 : i32
    return %c0_i32, %c0_i32_0 : i32, i32
  }
  func.func @transform_3(%arg0: i32) -> (i32, i32) {
    %c0_i32 = arith.constant 0 : i32
    %c0_i32_0 = arith.constant 0 : i32
    %c0_i32_1 = arith.constant 0 : i32
    return %c0_i32, %c0_i32_0 : i32, i32
  }
  func.func @transform_4(%arg0: i32) -> (i32, i32) {
    %c0_i32 = arith.constant 0 : i32
    %c0_i32_0 = arith.constant 0 : i32
    %c0_i32_1 = arith.constant 0 : i32
    return %c0_i32, %c0_i32_0 : i32, i32
  }
  func.func @transform_5(%arg0: i32) -> (i32, i32) {
    %c0_i32 = arith.constant 0 : i32
    %c0_i32_0 = arith.constant 0 : i32
    %c0_i32_1 = arith.constant 0 : i32
    return %c0_i32, %c0_i32_0 : i32, i32
  }
  func.func @transform_6(%arg0: i32) -> (i32, i32) {
    %c0_i32 = arith.constant 0 : i32
    %c0_i32_0 = arith.constant 0 : i32
    return %arg0, %c0_i32 : i32, i32
  }
}

module attributes {stable_mosaic.version = 11 : i64} {
  func.func @blnn_kernel(%arg0: i32, %arg1: memref<32x4xbf16, #tpu.memory_space<vmem>>, %arg2: memref<4x128xbf16, #tpu.memory_space<vmem>>, %arg3: memref<1x128xf32, #tpu.memory_space<vmem>>, %arg4: memref<128x128xbf16, #tpu.memory_space<vmem>>, %arg5: memref<1x128xf32, #tpu.memory_space<vmem>>, %arg6: memref<128x128xbf16, #tpu.memory_space<vmem>>, %arg7: memref<32x128xf32, #tpu.memory_space<vmem>>) attributes {dimension_semantics = [#tpu.dimension_semantics<parallel>], iteration_bounds = array<i64: 2>, scalar_prefetch = 0 : i64, scratch_operands = 0 : i64, tpu.core_type = #tpu.core_type<tc>, window_params = [{transform_indices = @transform_0, window_bounds = array<i64: 32, 4>}, {pipeline_mode = #tpu.pipeline_mode<synchronous>, transform_indices = @transform_1, window_bounds = array<i64: 4, 128>}, {pipeline_mode = #tpu.pipeline_mode<synchronous>, transform_indices = @transform_2, window_bounds = array<i64: 1, 128>}, {pipeline_mode = #tpu.pipeline_mode<synchronous>, transform_indices = @transform_3, window_bounds = array<i64: 128, 128>}, {pipeline_mode = #tpu.pipeline_mode<synchronous>, transform_indices = @transform_4, window_bounds = array<i64: 1, 128>}, {pipeline_mode = #tpu.pipeline_mode<synchronous>, transform_indices = @transform_5, window_bounds = array<i64: 128, 128>}, {transform_indices = @transform_6, window_bounds = array<i64: 32, 128>}]} {
    %c0 = arith.constant 0 : index
    %c0_0 = arith.constant 0 : index
    %0 = vector.load %arg1[%c0, %c0_0] : memref<32x4xbf16, #tpu.memory_space<vmem>>, vector<32x4xbf16>
    %c0_1 = arith.constant 0 : index
    %c0_2 = arith.constant 0 : index
    %1 = vector.load %arg2[%c0_1, %c0_2] : memref<4x128xbf16, #tpu.memory_space<vmem>>, vector<4x128xbf16>
    %cst = arith.constant dense<0.000000e+00> : vector<32x128xf32>
    %2 = tpu.matmul %0, %1, %cst {dimension_numbers = #tpu.dot_dimension_numbers<[1], [0], [0], [1], [0, 0, 1, 1], [], []>} : vector<32x4xbf16>, vector<4x128xbf16>, vector<32x128xf32> -> vector<32x128xf32>
    %c0_3 = arith.constant 0 : index
    %c0_4 = arith.constant 0 : index
    %3 = vector.load %arg3[%c0_3, %c0_4] : memref<1x128xf32, #tpu.memory_space<vmem>>, vector<1x128xf32>
    %4 = vector.broadcast %3 : vector<1x128xf32> to vector<32x128xf32>
    %5 = arith.addf %2, %4 : vector<32x128xf32>
    %6 = math.tanh %5 : vector<32x128xf32>
    %7 = arith.truncf %6 : vector<32x128xf32> to vector<32x128xbf16>
    %c0_5 = arith.constant 0 : index
    %c0_6 = arith.constant 0 : index
    %8 = vector.load %arg4[%c0_5, %c0_6] : memref<128x128xbf16, #tpu.memory_space<vmem>>, vector<128x128xbf16>
    %cst_7 = arith.constant dense<0.000000e+00> : vector<32x128xf32>
    %9 = tpu.matmul %7, %8, %cst_7 {dimension_numbers = #tpu.dot_dimension_numbers<[1], [0], [0], [1], [0, 0, 1, 1], [], []>} : vector<32x128xbf16>, vector<128x128xbf16>, vector<32x128xf32> -> vector<32x128xf32>
    %c0_8 = arith.constant 0 : index
    %c0_9 = arith.constant 0 : index
    %10 = vector.load %arg5[%c0_8, %c0_9] : memref<1x128xf32, #tpu.memory_space<vmem>>, vector<1x128xf32>
    %11 = vector.broadcast %10 : vector<1x128xf32> to vector<32x128xf32>
    %12 = arith.addf %9, %11 : vector<32x128xf32>
    %13 = math.tanh %12 : vector<32x128xf32>
    %14 = arith.truncf %13 : vector<32x128xf32> to vector<32x128xbf16>
    %c0_10 = arith.constant 0 : index
    %c0_11 = arith.constant 0 : index
    %15 = vector.load %arg6[%c0_10, %c0_11] : memref<128x128xbf16, #tpu.memory_space<vmem>>, vector<128x128xbf16>
    %cst_12 = arith.constant dense<0.000000e+00> : vector<32x128xf32>
    %16 = tpu.matmul %14, %15, %cst_12 {dimension_numbers = #tpu.dot_dimension_numbers<[1], [0], [0], [1], [0, 0, 1, 1], [], []>} : vector<32x128xbf16>, vector<128x128xbf16>, vector<32x128xf32> -> vector<32x128xf32>
    %c0_13 = arith.constant 0 : index
    %c0_14 = arith.constant 0 : index
    %17 = vector.load %arg7[%c0_13, %c0_14] : memref<32x128xf32, #tpu.memory_space<vmem>>, vector<32x128xf32>
    tpu.vector_store %arg7[%c0_13, %c0_14], %16 {strides = array<i32>} : memref<32x128xf32, #tpu.memory_space<vmem>>, vector<32x128xf32>,
    return
  }
  func.func @transform_0(%arg0: i32) -> (i32, i32) {
    %c0_i32 = arith.constant 0 : i32
    %c0_i32_0 = arith.constant 0 : i32
    return %arg0, %c0_i32 : i32, i32
  }
  func.func @transform_1(%arg0: i32) -> (i32, i32) {
    %c0_i32 = arith.constant 0 : i32
    %c0_i32_0 = arith.constant 0 : i32
    %c0_i32_1 = arith.constant 0 : i32
    return %c0_i32, %c0_i32_0 : i32, i32
  }
  func.func @transform_2(%arg0: i32) -> (i32, i32) {
    %c0_i32 = arith.constant 0 : i32
    %c0_i32_0 = arith.constant 0 : i32
    %c0_i32_1 = arith.constant 0 : i32
    return %c0_i32, %c0_i32_0 : i32, i32
  }
  func.func @transform_3(%arg0: i32) -> (i32, i32) {
    %c0_i32 = arith.constant 0 : i32
    %c0_i32_0 = arith.constant 0 : i32
    %c0_i32_1 = arith.constant 0 : i32
    return %c0_i32, %c0_i32_0 : i32, i32
  }
  func.func @transform_4(%arg0: i32) -> (i32, i32) {
    %c0_i32 = arith.constant 0 : i32
    %c0_i32_0 = arith.constant 0 : i32
    %c0_i32_1 = arith.constant 0 : i32
    return %c0_i32, %c0_i32_0 : i32, i32
  }
  func.func @transform_5(%arg0: i32) -> (i32, i32) {
    %c0_i32 = arith.constant 0 : i32
    %c0_i32_0 = arith.constant 0 : i32
    %c0_i32_1 = arith.constant 0 : i32
    return %c0_i32, %c0_i32_0 : i32, i32
  }
  func.func @transform_6(%arg0: i32) -> (i32, i32) {
    %c0_i32 = arith.constant 0 : i32
    %c0_i32_0 = arith.constant 0 : i32
    return %arg0, %c0_i32 : i32, i32
  }
}

</mosaic_0001>

<llo_original>
// kernel: tpu_custom_call.1
$region0: #{tpu_custom_call.1}
  #allocation0 [shape = 'u32[]', space=smem, size = 0x4, offset = 0x4, fixed_abs, tag = 'smem constant byte address 0x4 - core index']
  #allocation1 [shape = 'u32[144,128]{1,0:T(1,128)}', space=vmem, size = 0x12000, scoped, tag = 'internal scratch']
  %s0 = inlined_call_operand.vmem [shape: bf16[64,4], index: 0, kind: input, shape index: {}]
  %s1 = inlined_call_operand.vmem [shape: bf16[4,128], index: 1, kind: input, shape index: {}]
  %s2 = inlined_call_operand.vmem [shape: f32[1,128], index: 2, kind: input, shape index: {}]
  %s3 = inlined_call_operand.hbm [shape: bf16[128,128], index: 3, kind: input, shape index: {}]
  %s4 = inlined_call_operand.vmem [shape: f32[1,128], index: 4, kind: input, shape index: {}]
  %s5 = inlined_call_operand.hbm [shape: bf16[128,128], index: 5, kind: input, shape index: {}]
  %s6 = inlined_call_operand.hbm [shape: f32[64,128], index: 6, kind: output, shape index: {}]
  %s7 = sld [smem:[#allocation0]]
  $region65: #{tpu_custom_call.1} parent=0
    _
  %s9 = ssub.s32 1, %s7
  %s10 = scalar_select 0, %s9, %s7
  $region1: #{tpu_custom_call.1} parent=0
    #allocation2 [shape = 'u8[32768]{0}', space=vmem, size = 0x8000, scoped, tag = 'input window, operand 3, single buffered']
    #allocation3 [shape = 's32[2]{0}', space=sflag, size = 0x8, scoped, tag = 'scoped memory for tpu_custom_call.1']
    #allocation4 [shape = 's32[2]{0}', space=sflag, size = 0x8, scoped, tag = 'scoped memory for tpu_custom_call.1']
    #allocation5 [shape = 'u8[32768]{0}', space=vmem, size = 0x8000, scoped, tag = 'input window, operand 5, single buffered']
    #allocation6 [shape = 's32[1]{0}', space=sflag, size = 0x4, scoped, tag = 'scoped memory for tpu_custom_call.1']
    #allocation7 [shape = 'u8[32768]{0}', space=vmem, size = 0x8000, scoped, tag = 'output window, operand 0']
    %11 = vsyncpa [#allocation3], 0
    %12 = vsyncpa [#allocation6], 0
    %13 = vsyncpa [#allocation4], 0
    %s14 = scalar_lea.sflag [#allocation4], 1
    %15 = vsyncpa %s14, 0
    loop: start=0, step=1, limit=4
    $region2: #{tpu_custom_call.1} parent=1 // loop_pre_header
      _
    $region3: #{tpu_custom_call.1} parent=1 // loop_header
      %s17 = sphi 0, %s21
      %p18 = scmp.ge.s32.totalorder %s17, 4
      %s27 = sphi 0, %s29
      %s30 = sphi 0, %s27
      %s31 = sphi 0, %s30
      %s47 = sphi 0, %s31
      %s51 = sphi 0, %s51
      %s53 = sphi 0, %s51
      %s54 = sphi 0, %s53
      %s68 = sphi 0, %s54
      %s72 = sphi 0, %s72
      %s74 = sphi 0, %s72
      %s75 = sphi 0, %s74
      %s89 = sphi 0, %s75
      %s93 = sphi 0, %s93
      %s95 = sphi 0, %s93
      %s96 = sphi 0, %s95
      %s110 = sphi 0, %s96
      %s114 = sphi 0, %s114
      %s116 = sphi 0, %s114
      %s117 = sphi 0, %s116
      %s131 = sphi 0, %s117
      %s135 = sphi 0, %s135
      %s137 = sphi 0, %s135
      %s138 = sphi 0, %s137
      %s152 = sphi 0, %s138
      %s158 = sphi 0, %s160
      %s161 = sphi 0, %s158
      %s162 = sphi 0, %s161
      %s178 = sphi 0, %s162
    $region4: #{tpu_custom_call.1} parent=1 // loop_header_branch
      %20 = sbr.rel (%p18) target = $region8
    $region5: #{tpu_custom_call.1} parent=1 // loop_body
      %s22 = ssub.s32 %s17, 1
      %s23 = ssub.s32 %s17, 2
      %s24 = sadd.s32 %s17, 1
      %s25 = ssub.s32 %s17, %s24
      %p26 = scmp.eq.s32.totalorder %s25, 0
      %s28 = sadd.s32 %s27, 1
      %s29 = scalar_select %p26, %s27, %s28
      %p32 = pneg %p26
      %p33 = scmp.eq.s32.totalorder %s17, 1
      %p34 = por %p32, %p33
      %p35 = scmp.ne.s32.totalorder %s27, %s30
      %p36 = scmp.eq.s32.totalorder %s17, 0
      %p37 = por %p35, %p36
      %p38 = scmp.ne.s32.totalorder %s27, %s30
      %p39 = scmp.eq.s32.totalorder %s22, 1
      %p40 = por %p38, %p39
      %p41 = scmp.ne.s32.totalorder %s30, %s31
      %p42 = scmp.eq.s32.totalorder %s22, 0
      %p43 = por %p41, %p42
      %p44 = scmp.ne.s32.totalorder %s30, %s31
      %p45 = scmp.eq.s32.totalorder %s23, 1
      %p46 = por %p44, %p45
      %p48 = scmp.ne.s32.totalorder %s31, %s47
      %p49 = scmp.eq.s32.totalorder %s23, 0
      %p50 = por %p48, %p49
      %s52 = sadd.s32 %s51, 1
      %p55 = scmp.eq.s32.totalorder %s17, 1
      %p56 = scmp.ne.s32.totalorder %s51, %s53
      %p57 = scmp.eq.s32.totalorder %s17, 0
      %p58 = por %p56, %p57
      %p59 = scmp.ne.s32.totalorder %s51, %s53
      %p60 = scmp.eq.s32.totalorder %s22, 1
      %p61 = por %p59, %p60
      %p62 = scmp.ne.s32.totalorder %s53, %s54
      %p63 = scmp.eq.s32.totalorder %s22, 0
      %p64 = por %p62, %p63
      %p65 = scmp.ne.s32.totalorder %s53, %s54
      %p66 = scmp.eq.s32.totalorder %s23, 1
      %p67 = por %p65, %p66
      %p69 = scmp.ne.s32.totalorder %s54, %s68
      %p70 = scmp.eq.s32.totalorder %s23, 0
      %p71 = por %p69, %p70
      %s73 = sadd.s32 %s72, 1
      %p76 = scmp.eq.s32.totalorder %s17, 1
      %p77 = scmp.ne.s32.totalorder %s72, %s74
      %p78 = scmp.eq.s32.totalorder %s17, 0
      %p79 = por %p77, %p78
      %p80 = scmp.ne.s32.totalorder %s72, %s74
      %p81 = scmp.eq.s32.totalorder %s22, 1
      %p82 = por %p80, %p81
      %p83 = scmp.ne.s32.totalorder %s74, %s75
      %p84 = scmp.eq.s32.totalorder %s22, 0
      %p85 = por %p83, %p84
      %p86 = scmp.ne.s32.totalorder %s74, %s75
      %p87 = scmp.eq.s32.totalorder %s23, 1
      %p88 = por %p86, %p87
      %p90 = scmp.ne.s32.totalorder %s75, %s89
      %p91 = scmp.eq.s32.totalorder %s23, 0
      %p92 = por %p90, %p91
      %s94 = sadd.s32 %s93, 1
      %p97 = scmp.eq.s32.totalorder %s17, 1
      %p98 = scmp.ne.s32.totalorder %s93, %s95
      %p99 = scmp.eq.s32.totalorder %s17, 0
      %p100 = por %p98, %p99
      %p101 = scmp.ne.s32.totalorder %s93, %s95
      %p102 = scmp.eq.s32.totalorder %s22, 1
      %p103 = por %p101, %p102
      %p104 = scmp.ne.s32.totalorder %s95, %s96
      %p105 = scmp.eq.s32.totalorder %s22, 0
      %p106 = por %p104, %p105
      %p107 = scmp.ne.s32.totalorder %s95, %s96
      %p108 = scmp.eq.s32.totalorder %s23, 1
      %p109 = por %p107, %p108
      %p111 = scmp.ne.s32.totalorder %s96, %s110
      %p112 = scmp.eq.s32.totalorder %s23, 0
      %p113 = por %p111, %p112
      %s115 = sadd.s32 %s114, 1
      %p118 = scmp.eq.s32.totalorder %s17, 1
      %p119 = scmp.ne.s32.totalorder %s114, %s116
      %p120 = scmp.eq.s32.totalorder %s17, 0
      %p121 = por %p119, %p120
      %p122 = scmp.ne.s32.totalorder %s114, %s116
      %p123 = scmp.eq.s32.totalorder %s22, 1
      %p124 = por %p122, %p123
      %p125 = scmp.ne.s32.totalorder %s116, %s117
      %p126 = scmp.eq.s32.totalorder %s22, 0
      %p127 = por %p125, %p126
      %p128 = scmp.ne.s32.totalorder %s116, %s117
      %p129 = scmp.eq.s32.totalorder %s23, 1
      %p130 = por %p128, %p129
      %p132 = scmp.ne.s32.totalorder %s117, %s131
      %p133 = scmp.eq.s32.totalorder %s23, 0
      %p134 = por %p132, %p133
      %s136 = sadd.s32 %s135, 1
      %p139 = scmp.eq.s32.totalorder %s17, 1
      %p140 = scmp.ne.s32.totalorder %s135, %s137
      %p141 = scmp.eq.s32.totalorder %s17, 0
      %p142 = por %p140, %p141
      %p143 = scmp.ne.s32.totalorder %s135, %s137
      %p144 = scmp.eq.s32.totalorder %s22, 1
      %p145 = por %p143, %p144
      %p146 = scmp.ne.s32.totalorder %s137, %s138
      %p147 = scmp.eq.s32.totalorder %s22, 0
      %p148 = por %p146, %p147
      %p149 = scmp.ne.s32.totalorder %s137, %s138
      %p150 = scmp.eq.s32.totalorder %s23, 1
      %p151 = por %p149, %p150
      %p153 = scmp.ne.s32.totalorder %s138, %s152
      %p154 = scmp.eq.s32.totalorder %s23, 0
      %p155 = por %p153, %p154
      %s156 = ssub.s32 %s17, %s24
      %p157 = scmp.eq.s32.totalorder %s156, 0
      %s159 = sadd.s32 %s158, 1
      %s160 = scalar_select %p157, %s158, %s159
      %p163 = pneg %p157
      %p164 = scmp.eq.s32.totalorder %s17, 1
      %p165 = por %p163, %p164
      %p166 = scmp.ne.s32.totalorder %s158, %s161
      %p167 = scmp.eq.s32.totalorder %s17, 0
      %p168 = por %p166, %p167
      %p169 = scmp.ne.s32.totalorder %s158, %s161
      %p170 = scmp.eq.s32.totalorder %s22, 1
      %p171 = por %p169, %p170
      %p172 = scmp.ne.s32.totalorder %s161, %s162
      %p173 = scmp.eq.s32.totalorder %s22, 0
      %p174 = por %p172, %p173
      %p175 = scmp.ne.s32.totalorder %s161, %s162
      %p176 = scmp.eq.s32.totalorder %s23, 1
      %p177 = por %p175, %p176
      %p179 = scmp.ne.s32.totalorder %s162, %s178
      %p180 = scmp.eq.s32.totalorder %s23, 0
      %p181 = por %p179, %p180
      %p182 = scmp.le.s32.totalorder 1, %s17
      %p183 = scmp.lt.s32.totalorder %s17, 3
      %p184 = pnand %p182, %p183
      %p185 = pneg %p184
      // Predicated region
      $region9: #{tpu_custom_call.1} parent=5 // pred_check
        _
      $region10: #{tpu_custom_call.1} parent=5 // pred_check_branch
        %187 = sbr.rel (%p184) target = $region12
      $region11: #{tpu_custom_call.1} parent=5 // pred_region
        %s188 = ssub.s32 %s17, 1
        // Predicated region
        $region13: #{tpu_custom_call.1} parent=11 // pred_check
          %p189 = pneg %p64
        $region14: #{tpu_custom_call.1} parent=11 // pred_check_branch
          %191 = sbr.rel (%p189) target = $region16
        $region15: #{tpu_custom_call.1} parent=11 // pred_region
          _
        $region16: #{tpu_custom_call.1} parent=11 // pred_fallthru
          _
        // Predicated region
        $region17: #{tpu_custom_call.1} parent=11 // pred_check
          %p192 = pneg %p85
        $region18: #{tpu_custom_call.1} parent=11 // pred_check_branch
          %194 = sbr.rel (%p192) target = $region20
        $region19: #{tpu_custom_call.1} parent=11 // pred_region
          _
        $region20: #{tpu_custom_call.1} parent=11 // pred_fallthru
          _
        // Predicated region
        $region21: #{tpu_custom_call.1} parent=11 // pred_check
          %p195 = pneg %p106
        $region22: #{tpu_custom_call.1} parent=11 // pred_check_branch
          %197 = sbr.rel (%p195) target = $region24
        $region23: #{tpu_custom_call.1} parent=11 // pred_region
          %s199 = ssub.s32 1024, 1024
          %200 = vsyncadd [#allocation3], %s199
          %s201 = sshll.u32 [#allocation2], 4
          %s202 = int_to_ptr.vmem [resolvable:$true] %s201
          %207 = dma.hbm_to_vmem [thread:$0]  %s3, 1024, %s202, [#allocation3], 64, 64, 4
        $region24: #{tpu_custom_call.1} parent=11 // pred_fallthru
          _
        // Predicated region
        $region25: #{tpu_custom_call.1} parent=11 // pred_check
          %p208 = pneg %p127
        $region26: #{tpu_custom_call.1} parent=11 // pred_check_branch
          %210 = sbr.rel (%p208) target = $region28
        $region27: #{tpu_custom_call.1} parent=11 // pred_region
          _
        $region28: #{tpu_custom_call.1} parent=11 // pred_fallthru
          _
        // Predicated region
        $region29: #{tpu_custom_call.1} parent=11 // pred_check
          %p211 = pneg %p148
        $region30: #{tpu_custom_call.1} parent=11 // pred_check_branch
          %213 = sbr.rel (%p211) target = $region32
        $region31: #{tpu_custom_call.1} parent=11 // pred_region
          %s215 = ssub.s32 1024, 1024
          %216 = vsyncadd [#allocation6], %s215
          %s217 = sshll.u32 [#allocation5], 4
          %s218 = int_to_ptr.vmem [resolvable:$true] %s217
          %223 = dma.hbm_to_vmem [thread:$0]  %s5, 1024, %s218, [#allocation6], 64, 64, 4
        $region32: #{tpu_custom_call.1} parent=11 // pred_fallthru
          _
      $region12: #{tpu_custom_call.1} parent=5 // pred_fallthru
        _
      %p224 = scmp.lt.s32.totalorder %s17, 2
      // Predicated region
      $region33: #{tpu_custom_call.1} parent=5 // pred_check
        %p225 = pneg %p224
      $region34: #{tpu_custom_call.1} parent=5 // pred_check_branch
        %227 = sbr.rel (%p225) target = $region36
      $region35: #{tpu_custom_call.1} parent=5 // pred_region
        // Predicated region
        $region37: #{tpu_custom_call.1} parent=35 // pred_check
          %p228 = pneg %p37
        $region38: #{tpu_custom_call.1} parent=35 // pred_check_branch
          %230 = sbr.rel (%p228) target = $region40
        $region39: #{tpu_custom_call.1} parent=35 // pred_region
          %s231 = smul.u32 4, %s17
          %p232 = scmp.lt.s32.totalorder %s231, 7
          %s233 = scalar_select %p232, %s231, 7
          %s234 = smul.addr %s233, 4
          %s235 = scalar_lea.vmem %s0, %s234
          %s236 = smul.u32 4, %s17
        $region40: #{tpu_custom_call.1} parent=35 // pred_fallthru
          _
      $region36: #{tpu_custom_call.1} parent=5 // pred_fallthru
        _
      %p237 = scmp.le.s32.totalorder 1, %s17
      %p238 = scmp.lt.s32.totalorder %s17, 3
      %p239 = pnand %p237, %p238
      %p240 = pneg %p239
      // Predicated region
      $region41: #{tpu_custom_call.1} parent=5 // pred_check
        _
      $region42: #{tpu_custom_call.1} parent=5 // pred_check_branch
        %242 = sbr.rel (%p239) target = $region44
      $region43: #{tpu_custom_call.1} parent=5 // pred_region
        %s243 = ssub.s32 %s17, 1
        // Predicated region
        $region45: #{tpu_custom_call.1} parent=43 // pred_check
          %p244 = pneg %p106
        $region46: #{tpu_custom_call.1} parent=43 // pred_check_branch
          %246 = sbr.rel (%p244) target = $region48
        $region47: #{tpu_custom_call.1} parent=43 // pred_region
          %247 = dma.done [#allocation3], 1024
        $region48: #{tpu_custom_call.1} parent=43 // pred_fallthru
          _
        // Predicated region
        $region49: #{tpu_custom_call.1} parent=43 // pred_check
          %p248 = pneg %p148
        $region50: #{tpu_custom_call.1} parent=43 // pred_check_branch
          %250 = sbr.rel (%p248) target = $region52
        $region51: #{tpu_custom_call.1} parent=43 // pred_region
          %251 = dma.done [#allocation6], 1024
        $region52: #{tpu_custom_call.1} parent=43 // pred_fallthru
          _
        %s252 = smul.u32 4, %s22
        %p253 = scmp.lt.s32.totalorder %s252, 7
        %s254 = scalar_select %p253, %s252, 7
        %s255 = smul.addr %s254, 4
        %s256 = scalar_lea.vmem %s0, %s255
        %p257 = pneg %p43
        %p258 = pneg %p40
        %p259 = pneg %p64
        %p260 = pneg %p61
        %p261 = pneg %p85
        %p262 = pneg %p82
        %p263 = pneg %p106
        %p264 = pneg %p103
        %p265 = pneg %p127
        %p266 = pneg %p124
        %p267 = pneg %p148
        %p268 = pneg %p145
        %p269 = pneg %p174
        %p270 = pneg %p171
        %s271 = sand.u32 %s161, 1
        %s272 = scalar_lea.sflag [#allocation4], %s271
        %s273 = sand.u32 %s161, 1
        %s274 = smul.addr %s273, 32
        %s275 = scalar_lea.vmem [#allocation7], %s274
        %s276 = smul.u32 4, %s22
        %p277 = scmp.lt.s32.totalorder %s276, 7
        %s278 = scalar_select %p277, %s276, 7
        %s279 = smul.addr %s278, 4
        %s280 = scalar_lea.vmem %s0, %s279
        %s281 = smul.u32 4, %s22
        %s282 = smul.u32 4, %s22
        %v284 = vld [vmem:[%s280] sm:$0xf]
        %v285 = vld [vmem:[%s280 + $0x4] sm:$0xf]
        %v286 = vld [vmem:[%s280 + $0x8] sm:$0xf]
        %v287 = vld [vmem:[%s280 + $0xc] sm:$0xf]
        %v288 = vld [vmem:[%s1] sm:$0x3]
        %v289 = vld [vmem:[%s2] sm:$0x1]
        %v291 = vlaneseq
        %v292 = vshrl.u32 %v291, 7
        %v293 = vsub.s32 0, %v292
        %v294 = vrot.slane %v289, %v293
        %v300 = vunpack.c.l.b16 %v284
        %v301 = vunpack.c.l.b16 %v285
        %v302 = vunpack.c.l.b16 %v286
        %v303 = vunpack.c.l.b16 %v287
        %v304 = vpack.c.b16 %v301, %v300
        %v305 = vpack.c.b16 %v303, %v302
        %vm306 = vcmask 31744
        %v308 = vsel %vm306, %v304, 0
        %v311 = vsel %vm306, %v305, 0
        %vm313 = vcmask 1041408
        %v315 = vsel %vm313, %v288, 0
        %317 = vmatprep.subr.bf16.mxu0 0
        %318 = vmatpush1.bf16.msra.mxu0 0
        %319 = vmatprep.subr.bf16.mxu0 0
        %320 = vmatpush1.bf16.msra.mxu0 0
        %321 = vmatprep.subr.bf16.mxu0 0
        %322 = vmatpush1.bf16.msra.mxu0 0
        %323 = vmatprep.subr.bf16.mxu0 0
        %324 = vmatpush1.bf16.msra.mxu0 0
        %325 = vmatprep.subr.bf16.mxu0 0
        %326 = vmatpush1.bf16.msra.mxu0 0
        %327 = vmatprep.subr.bf16.mxu0 0
        %328 = vmatpush1.bf16.msra.mxu0 0
        %329 = vmatprep.subr.bf16.mxu0 0
        %330 = vmatpush1.bf16.msra.mxu0 0
        %331 = vmatprep.subr.bf16.mxu0 0
        %332 = vmatpush1.bf16.msra.mxu0 %v315
        %333 = vmatprep.subr.bf16.mxu0 0
        %334 = vmatpush2.bf16.msra.mxu0 0
        %335 = vmatprep.subr.bf16.mxu0 0
        %336 = vmatpush2.bf16.msra.mxu0 0
        %337 = vmatprep.subr.bf16.mxu0 0
        %338 = vmatpush2.bf16.msra.mxu0 0
        %339 = vmatprep.subr.bf16.mxu0 0
        %340 = vmatpush2.bf16.msra.mxu0 0
        %341 = vmatprep.subr.bf16.mxu0 0
        %342 = vmatpush2.bf16.msra.mxu0 0
        %343 = vmatprep.subr.bf16.mxu0 0
        %344 = vmatpush2.bf16.msra.mxu0 0
        %345 = vmatprep.subr.bf16.mxu0 0
        %346 = vmatpush2.bf16.msra.mxu0 0
        %347 = vmatprep.subr.bf16.mxu0 0
        %348 = vmatpush2.bf16.msra.mxu0 0
        %349 = vmatprep.mubr.bf16.mxu0 0
        %350 = vmatmul.mubr.bf16.gmra.mxu0 %v308
        %v351 = vpop.f32.mrf.mxu0
        %v352 = vadd.f32 %v294, %v351
        %v353 = vpop.f32.mrf.mxu0
        %v354 = vpop.f32.mrf.mxu0
        %v355 = vadd.f32 %v294, %v354
        %v356 = vpop.f32.mrf.mxu0
        %357 = vmatprep.mubr.bf16.mxu0 0
        %358 = vmatmul.mubr.bf16.gmra.mxu0 %v311
        %v359 = vpop.f32.mrf.mxu0
        %v360 = vadd.f32 %v294, %v359
        %v361 = vpop.f32.mrf.mxu0
        %v362 = vpop.f32.mrf.mxu0
        %v363 = vadd.f32 %v294, %v362
        %v364 = vpop.f32.mrf.mxu0
        %365 = vdwg.mxu0
        %v366 = vtanh.pop %v352
        %v367 = vtanh.pop %v355
        %v368 = vtanh.pop %v360
        %v369 = vtanh.pop %v363
        %v370 = vpack.c.bf16 %v367, %v366
        %v371 = vpack.c.bf16 %v369, %v368
        %v372 = vld [vmem:[#allocation2] sm:$0xf]
        %v373 = vld [vmem:[#allocation2 + $0x4] sm:$0xf]
        %v374 = vld [vmem:[#allocation2 + $0x8] sm:$0xf]
        %v375 = vld [vmem:[#allocation2 + $0xc] sm:$0xf]
        %v376 = vld [vmem:[#allocation2 + $0x10] sm:$0xf]
        %v377 = vld [vmem:[#allocation2 + $0x14] sm:$0xf]
        %v378 = vld [vmem:[#allocation2 + $0x18] sm:$0xf]
        %v379 = vld [vmem:[#allocation2 + $0x1c] sm:$0xf]
        %v380 = vld [vmem:[#allocation2 + $0x20] sm:$0xf]
        %v381 = vld [vmem:[#allocation2 + $0x24] sm:$0xf]
        %v382 = vld [vmem:[#allocation2 + $0x28] sm:$0xf]
        %v383 = vld [vmem:[#allocation2 + $0x2c] sm:$0xf]
        %v384 = vld [vmem:[#allocation2 + $0x30] sm:$0xf]
        %v385 = vld [vmem:[#allocation2 + $0x34] sm:$0xf]
        %v386 = vld [vmem:[#allocation2 + $0x38] sm:$0xf]
        %v387 = vld [vmem:[#allocation2 + $0x3c] sm:$0xf]
        %v388 = vld [vmem:[%s4] sm:$0x1]
        %v390 = vlaneseq
        %v391 = vshrl.u32 %v390, 7
        %v392 = vsub.s32 0, %v391
        %v393 = vrot.slane %v388, %v392
        %v411 = vunpack.c.l.b16 %v372
        %v412 = vunpack.c.l.b16 %v373
        %v413 = vunpack.c.l.b16 %v374
        %v414 = vunpack.c.l.b16 %v375
        %v415 = vunpack.c.l.b16 %v376
        %v416 = vunpack.c.l.b16 %v377
        %v417 = vunpack.c.l.b16 %v378
        %v418 = vunpack.c.l.b16 %v379
        %v419 = vunpack.c.l.b16 %v380
        %v420 = vunpack.c.l.b16 %v381
        %v421 = vunpack.c.l.b16 %v382
        %v422 = vunpack.c.l.b16 %v383
        %v423 = vunpack.c.l.b16 %v384
        %v424 = vunpack.c.l.b16 %v385
        %v425 = vunpack.c.l.b16 %v386
        %v426 = vunpack.c.l.b16 %v387
        %v427 = vpack.c.b16 %v412, %v411
        %v428 = vpack.c.b16 %v414, %v413
        %v429 = vpack.c.b16 %v416, %v415
        %v430 = vpack.c.b16 %v418, %v417
        %v431 = vpack.c.b16 %v420, %v419
        %v432 = vpack.c.b16 %v422, %v421
        %v433 = vpack.c.b16 %v424, %v423
        %v434 = vpack.c.b16 %v426, %v425
        %443 = vmatprep.subr.bf16.mxu0 0
        %444 = vmatpush1.bf16.msra.mxu0 %v434
        %445 = vmatprep.subr.bf16.mxu0 0
        %446 = vmatpush1.bf16.msra.mxu0 %v433
        %447 = vmatprep.subr.bf16.mxu0 0
        %448 = vmatpush1.bf16.msra.mxu0 %v432
        %449 = vmatprep.subr.bf16.mxu0 0
        %450 = vmatpush1.bf16.msra.mxu0 %v431
        %451 = vmatprep.subr.bf16.mxu0 0
        %452 = vmatpush1.bf16.msra.mxu0 %v430
        %453 = vmatprep.subr.bf16.mxu0 0
        %454 = vmatpush1.bf16.msra.mxu0 %v429
        %455 = vmatprep.subr.bf16.mxu0 0
        %456 = vmatpush1.bf16.msra.mxu0 %v428
        %457 = vmatprep.subr.bf16.mxu0 0
        %458 = vmatpush1.bf16.msra.mxu0 %v427
        %459 = vmatprep.subr.bf16.mxu0 0
        %460 = vmatpush2.bf16.msra.mxu0 0
        %461 = vmatprep.subr.bf16.mxu0 0
        %462 = vmatpush2.bf16.msra.mxu0 0
        %463 = vmatprep.subr.bf16.mxu0 0
        %464 = vmatpush2.bf16.msra.mxu0 0
        %465 = vmatprep.subr.bf16.mxu0 0
        %466 = vmatpush2.bf16.msra.mxu0 0
        %467 = vmatprep.subr.bf16.mxu0 0
        %468 = vmatpush2.bf16.msra.mxu0 0
        %469 = vmatprep.subr.bf16.mxu0 0
        %470 = vmatpush2.bf16.msra.mxu0 0
        %471 = vmatprep.subr.bf16.mxu0 0
        %472 = vmatpush2.bf16.msra.mxu0 0
        %473 = vmatprep.subr.bf16.mxu0 0
        %474 = vmatpush2.bf16.msra.mxu0 0
        %475 = vmatprep.mubr.bf16.mxu0 0
        %476 = vmatmul.mubr.bf16.gmra.mxu0 %v370
        %v477 = vpop.f32.mrf.mxu0
        %v478 = vadd.f32 %v393, %v477
        %v479 = vpop.f32.mrf.mxu0
        %v480 = vpop.f32.mrf.mxu0
        %v481 = vadd.f32 %v393, %v480
        %v482 = vpop.f32.mrf.mxu0
        %483 = vmatprep.mubr.bf16.mxu0 0
        %484 = vmatmul.mubr.bf16.gmra.mxu0 %v371
        %v485 = vpop.f32.mrf.mxu0
        %v486 = vadd.f32 %v393, %v485
        %v487 = vpop.f32.mrf.mxu0
        %v488 = vpop.f32.mrf.mxu0
        %v489 = vadd.f32 %v393, %v488
        %v490 = vpop.f32.mrf.mxu0
        %491 = vdwg.mxu0
        %v492 = vtanh.pop %v478
        %v493 = vtanh.pop %v481
        %v494 = vtanh.pop %v486
        %v495 = vtanh.pop %v489
        %v496 = vpack.c.bf16 %v493, %v492
        %v497 = vpack.c.bf16 %v495, %v494
        %v498 = vld [vmem:[#allocation5] sm:$0xf]
        %v499 = vld [vmem:[#allocation5 + $0x4] sm:$0xf]
        %v500 = vld [vmem:[#allocation5 + $0x8] sm:$0xf]
        %v501 = vld [vmem:[#allocation5 + $0xc] sm:$0xf]
        %v502 = vld [vmem:[#allocation5 + $0x10] sm:$0xf]
        %v503 = vld [vmem:[#allocation5 + $0x14] sm:$0xf]
        %v504 = vld [vmem:[#allocation5 + $0x18] sm:$0xf]
        %v505 = vld [vmem:[#allocation5 + $0x1c] sm:$0xf]
        %v506 = vld [vmem:[#allocation5 + $0x20] sm:$0xf]
        %v507 = vld [vmem:[#allocation5 + $0x24] sm:$0xf]
        %v508 = vld [vmem:[#allocation5 + $0x28] sm:$0xf]
        %v509 = vld [vmem:[#allocation5 + $0x2c] sm:$0xf]
        %v510 = vld [vmem:[#allocation5 + $0x30] sm:$0xf]
        %v511 = vld [vmem:[#allocation5 + $0x34] sm:$0xf]
        %v512 = vld [vmem:[#allocation5 + $0x38] sm:$0xf]
        %v513 = vld [vmem:[#allocation5 + $0x3c] sm:$0xf]
        %v530 = vunpack.c.l.b16 %v498
        %v531 = vunpack.c.l.b16 %v499
        %v532 = vunpack.c.l.b16 %v500
        %v533 = vunpack.c.l.b16 %v501
        %v534 = vunpack.c.l.b16 %v502
        %v535 = vunpack.c.l.b16 %v503
        %v536 = vunpack.c.l.b16 %v504
        %v537 = vunpack.c.l.b16 %v505
        %v538 = vunpack.c.l.b16 %v506
        %v539 = vunpack.c.l.b16 %v507
        %v540 = vunpack.c.l.b16 %v508
        %v541 = vunpack.c.l.b16 %v509
        %v542 = vunpack.c.l.b16 %v510
        %v543 = vunpack.c.l.b16 %v511
        %v544 = vunpack.c.l.b16 %v512
        %v545 = vunpack.c.l.b16 %v513
        %v546 = vpack.c.b16 %v531, %v530
        %v547 = vpack.c.b16 %v533, %v532
        %v548 = vpack.c.b16 %v535, %v534
        %v549 = vpack.c.b16 %v537, %v536
        %v550 = vpack.c.b16 %v539, %v538
        %v551 = vpack.c.b16 %v541, %v540
        %v552 = vpack.c.b16 %v543, %v542
        %v553 = vpack.c.b16 %v545, %v544
        %562 = vmatprep.subr.bf16.mxu0 0
        %563 = vmatpush1.bf16.msra.mxu0 %v553
        %564 = vmatprep.subr.bf16.mxu0 0
        %565 = vmatpush1.bf16.msra.mxu0 %v552
        %566 = vmatprep.subr.bf16.mxu0 0
        %567 = vmatpush1.bf16.msra.mxu0 %v551
        %568 = vmatprep.subr.bf16.mxu0 0
        %569 = vmatpush1.bf16.msra.mxu0 %v550
        %570 = vmatprep.subr.bf16.mxu0 0
        %571 = vmatpush1.bf16.msra.mxu0 %v549
        %572 = vmatprep.subr.bf16.mxu0 0
        %573 = vmatpush1.bf16.msra.mxu0 %v548
        %574 = vmatprep.subr.bf16.mxu0 0
        %575 = vmatpush1.bf16.msra.mxu0 %v547
        %576 = vmatprep.subr.bf16.mxu0 0
        %577 = vmatpush1.bf16.msra.mxu0 %v546
        %578 = vmatprep.subr.bf16.mxu0 0
        %579 = vmatpush2.bf16.msra.mxu0 0
        %580 = vmatprep.subr.bf16.mxu0 0
        %581 = vmatpush2.bf16.msra.mxu0 0
        %582 = vmatprep.subr.bf16.mxu0 0
        %583 = vmatpush2.bf16.msra.mxu0 0
        %584 = vmatprep.subr.bf16.mxu0 0
        %585 = vmatpush2.bf16.msra.mxu0 0
        %586 = vmatprep.subr.bf16.mxu0 0
        %587 = vmatpush2.bf16.msra.mxu0 0
        %588 = vmatprep.subr.bf16.mxu0 0
        %589 = vmatpush2.bf16.msra.mxu0 0
        %590 = vmatprep.subr.bf16.mxu0 0
        %591 = vmatpush2.bf16.msra.mxu0 0
        %592 = vmatprep.subr.bf16.mxu0 0
        %593 = vmatpush2.bf16.msra.mxu0 0
        %594 = vmatprep.mubr.bf16.mxu0 0
        %595 = vmatmul.mubr.bf16.gmra.mxu0 %v496
        %v596 = vpop.f32.mrf.mxu0
        %v597 = vadd.f32 0.0, %v596
        %v598 = vpop.f32.mrf.mxu0
        %v599 = vpop.f32.mrf.mxu0
        %v600 = vadd.f32 0.0, %v599
        %v601 = vpop.f32.mrf.mxu0
        %602 = vmatprep.mubr.bf16.mxu0 0
        %603 = vmatmul.mubr.bf16.gmra.mxu0 %v497
        %v604 = vpop.f32.mrf.mxu0
        %v605 = vadd.f32 0.0, %v604
        %v606 = vpop.f32.mrf.mxu0
        %v607 = vpop.f32.mrf.mxu0
        %v608 = vadd.f32 0.0, %v607
        %v609 = vpop.f32.mrf.mxu0
        %610 = vdwg.mxu0
        %611 = vst [vmem:[%s275] sm:$0xff] %v597
        %612 = vst [vmem:[%s275 + $0x8] sm:$0xff] %v600
        %613 = vst [vmem:[%s275 + $0x10] sm:$0xff] %v605
        %614 = vst [vmem:[%s275 + $0x18] sm:$0xff] %v608
        %s615 = sand.u32 %s161, 1
        %s616 = scalar_lea.sflag [#allocation4], %s615
        %s617 = sand.u32 %s161, 1
        %s618 = smul.addr %s617, 32
        %s619 = scalar_lea.vmem [#allocation7], %s618
        // Predicated region
        $region53: #{tpu_custom_call.1} parent=43 // pred_check
          %p620 = pneg %p171
        $region54: #{tpu_custom_call.1} parent=43 // pred_check_branch
          %622 = sbr.rel (%p620) target = $region56
        $region55: #{tpu_custom_call.1} parent=43 // pred_region
          %s623 = smul.u32 4, %s22
          %s625 = ssub.s32 512, 512
          %626 = vsyncadd %s616, %s625
          %s627 = smul.addr %s623, 128
          %s628 = scalar_lea.hbm %s6, %s627
          %s629 = sshll.u32 %s619, 4
          %s630 = int_to_ptr.vmem [resolvable:$true] %s629
          %635 = dma.vmem_to_hbm [thread:$0]  %s630, 512, %s628, %s616, 128, 128, 8
        $region56: #{tpu_custom_call.1} parent=43 // pred_fallthru
          _
      $region44: #{tpu_custom_call.1} parent=5 // pred_fallthru
        _
      %p636 = scmp.le.s32.totalorder 2, %s17
      // Predicated region
      $region57: #{tpu_custom_call.1} parent=5 // pred_check
        %p637 = pneg %p636
      $region58: #{tpu_custom_call.1} parent=5 // pred_check_branch
        %639 = sbr.rel (%p637) target = $region60
      $region59: #{tpu_custom_call.1} parent=5 // pred_region
        %s640 = ssub.s32 %s17, 2
        // Predicated region
        $region61: #{tpu_custom_call.1} parent=59 // pred_check
          %p641 = pneg %p177
        $region62: #{tpu_custom_call.1} parent=59 // pred_check_branch
          %643 = sbr.rel (%p641) target = $region64
        $region63: #{tpu_custom_call.1} parent=59 // pred_region
          %s644 = sand.u32 %s162, 1
          %s645 = scalar_lea.sflag [#allocation4], %s644
          %s646 = sand.u32 %s162, 1
          %s647 = smul.addr %s646, 32
          %s648 = scalar_lea.vmem [#allocation7], %s647
          %649 = dma.done %s645, 512
        $region64: #{tpu_custom_call.1} parent=59 // pred_fallthru
          _
      $region60: #{tpu_custom_call.1} parent=5 // pred_fallthru
        _
    $region6: #{tpu_custom_call.1} parent=1 // loop_footer
      %s21 = sadd.s32 1, %s17
    $region7: #{tpu_custom_call.1} parent=1 // loop_footer_branch
      %16 = sbr.rel target = $region3
    $region8: #{tpu_custom_call.1} parent=1 // loop_exit
      _
    %650 = vsyncpa [#allocation3], 1
    %s651 = scalar_lea.sflag [#allocation3], 1
    %652 = vsyncpa %s651, 1
    %653 = vsyncpa [#allocation6], 1
    %654 = vsyncpa [#allocation4], 1
    %s655 = scalar_lea.sflag [#allocation4], 1
    %656 = vsyncpa %s655, 1

// kernel: tpu_custom_call.1
$region0: #{tpu_custom_call.1}
  #allocation0 [shape = 'u32[]', space=smem, size = 0x4, offset = 0x4, fixed_abs, tag = 'smem constant byte address 0x4 - core index']
  #allocation1 [shape = 'u32[144,128]{1,0:T(1,128)}', space=vmem, size = 0x12000, scoped, tag = 'internal scratch']
  %s0 = inlined_call_operand.vmem [shape: bf16[64,4], index: 0, kind: input, shape index: {}]
  %s1 = inlined_call_operand.vmem [shape: bf16[4,128], index: 1, kind: input, shape index: {}]
  %s2 = inlined_call_operand.vmem [shape: f32[1,128], index: 2, kind: input, shape index: {}]
  %s3 = inlined_call_operand.hbm [shape: bf16[128,128], index: 3, kind: input, shape index: {}]
  %s4 = inlined_call_operand.vmem [shape: f32[1,128], index: 4, kind: input, shape index: {}]
  %s5 = inlined_call_operand.hbm [shape: bf16[128,128], index: 5, kind: input, shape index: {}]
  %s6 = inlined_call_operand.hbm [shape: f32[64,128], index: 6, kind: output, shape index: {}]
  %s7 = sld [smem:[#allocation0]]
  $region65: #{tpu_custom_call.1} parent=0
    _
  %s9 = ssub.s32 1, %s7
  %s10 = scalar_select 0, %s9, %s7
  $region1: #{tpu_custom_call.1} parent=0
    #allocation2 [shape = 'u8[32768]{0}', space=vmem, size = 0x8000, scoped, tag = 'input window, operand 3, single buffered']
    #allocation3 [shape = 's32[2]{0}', space=sflag, size = 0x8, scoped, tag = 'scoped memory for tpu_custom_call.1']
    #allocation4 [shape = 's32[2]{0}', space=sflag, size = 0x8, scoped, tag = 'scoped memory for tpu_custom_call.1']
    #allocation5 [shape = 'u8[32768]{0}', space=vmem, size = 0x8000, scoped, tag = 'input window, operand 5, single buffered']
    #allocation6 [shape = 's32[1]{0}', space=sflag, size = 0x4, scoped, tag = 'scoped memory for tpu_custom_call.1']
    #allocation7 [shape = 'u8[32768]{0}', space=vmem, size = 0x8000, scoped, tag = 'output window, operand 0']
    %11 = vsyncpa [#allocation3], 0
    %12 = vsyncpa [#allocation6], 0
    %13 = vsyncpa [#allocation4], 0
    %s14 = scalar_lea.sflag [#allocation4], 1
    %15 = vsyncpa %s14, 0
    loop: start=0, step=1, limit=4
    $region2: #{tpu_custom_call.1} parent=1 // loop_pre_header
      _
    $region3: #{tpu_custom_call.1} parent=1 // loop_header
      %s17 = sphi 0, %s21
      %p18 = scmp.ge.s32.totalorder %s17, 4
      %s27 = sphi 0, %s29
      %s30 = sphi 0, %s27
      %s31 = sphi 0, %s30
      %s47 = sphi 0, %s31
      %s51 = sphi 0, %s51
      %s53 = sphi 0, %s51
      %s54 = sphi 0, %s53
      %s68 = sphi 0, %s54
      %s72 = sphi 0, %s72
      %s74 = sphi 0, %s72
      %s75 = sphi 0, %s74
      %s89 = sphi 0, %s75
      %s93 = sphi 0, %s93
      %s95 = sphi 0, %s93
      %s96 = sphi 0, %s95
      %s110 = sphi 0, %s96
      %s114 = sphi 0, %s114
      %s116 = sphi 0, %s114
      %s117 = sphi 0, %s116
      %s131 = sphi 0, %s117
      %s135 = sphi 0, %s135
      %s137 = sphi 0, %s135
      %s138 = sphi 0, %s137
      %s152 = sphi 0, %s138
      %s158 = sphi 0, %s160
      %s161 = sphi 0, %s158
      %s162 = sphi 0, %s161
      %s178 = sphi 0, %s162
    $region4: #{tpu_custom_call.1} parent=1 // loop_header_branch
      %20 = sbr.rel (%p18) target = $region8
    $region5: #{tpu_custom_call.1} parent=1 // loop_body
      %s22 = ssub.s32 %s17, 1
      %s23 = ssub.s32 %s17, 2
      %s24 = sadd.s32 %s17, 1
      %s25 = ssub.s32 %s17, %s24
      %p26 = scmp.eq.s32.totalorder %s25, 0
      %s28 = sadd.s32 %s27, 1
      %s29 = scalar_select %p26, %s27, %s28
      %p32 = pneg %p26
      %p33 = scmp.eq.s32.totalorder %s17, 1
      %p34 = por %p32, %p33
      %p35 = scmp.ne.s32.totalorder %s27, %s30
      %p36 = scmp.eq.s32.totalorder %s17, 0
      %p37 = por %p35, %p36
      %p38 = scmp.ne.s32.totalorder %s27, %s30
      %p39 = scmp.eq.s32.totalorder %s22, 1
      %p40 = por %p38, %p39
      %p41 = scmp.ne.s32.totalorder %s30, %s31
      %p42 = scmp.eq.s32.totalorder %s22, 0
      %p43 = por %p41, %p42
      %p44 = scmp.ne.s32.totalorder %s30, %s31
      %p45 = scmp.eq.s32.totalorder %s23, 1
      %p46 = por %p44, %p45
      %p48 = scmp.ne.s32.totalorder %s31, %s47
      %p49 = scmp.eq.s32.totalorder %s23, 0
      %p50 = por %p48, %p49
      %s52 = sadd.s32 %s51, 1
      %p55 = scmp.eq.s32.totalorder %s17, 1
      %p56 = scmp.ne.s32.totalorder %s51, %s53
      %p57 = scmp.eq.s32.totalorder %s17, 0
      %p58 = por %p56, %p57
      %p59 = scmp.ne.s32.totalorder %s51, %s53
      %p60 = scmp.eq.s32.totalorder %s22, 1
      %p61 = por %p59, %p60
      %p62 = scmp.ne.s32.totalorder %s53, %s54
      %p63 = scmp.eq.s32.totalorder %s22, 0
      %p64 = por %p62, %p63
      %p65 = scmp.ne.s32.totalorder %s53, %s54
      %p66 = scmp.eq.s32.totalorder %s23, 1
      %p67 = por %p65, %p66
      %p69 = scmp.ne.s32.totalorder %s54, %s68
      %p70 = scmp.eq.s32.totalorder %s23, 0
      %p71 = por %p69, %p70
      %s73 = sadd.s32 %s72, 1
      %p76 = scmp.eq.s32.totalorder %s17, 1
      %p77 = scmp.ne.s32.totalorder %s72, %s74
      %p78 = scmp.eq.s32.totalorder %s17, 0
      %p79 = por %p77, %p78
      %p80 = scmp.ne.s32.totalorder %s72, %s74
      %p81 = scmp.eq.s32.totalorder %s22, 1
      %p82 = por %p80, %p81
      %p83 = scmp.ne.s32.totalorder %s74, %s75
      %p84 = scmp.eq.s32.totalorder %s22, 0
      %p85 = por %p83, %p84
      %p86 = scmp.ne.s32.totalorder %s74, %s75
      %p87 = scmp.eq.s32.totalorder %s23, 1
      %p88 = por %p86, %p87
      %p90 = scmp.ne.s32.totalorder %s75, %s89
      %p91 = scmp.eq.s32.totalorder %s23, 0
      %p92 = por %p90, %p91
      %s94 = sadd.s32 %s93, 1
      %p97 = scmp.eq.s32.totalorder %s17, 1
      %p98 = scmp.ne.s32.totalorder %s93, %s95
      %p99 = scmp.eq.s32.totalorder %s17, 0
      %p100 = por %p98, %p99
      %p101 = scmp.ne.s32.totalorder %s93, %s95
      %p102 = scmp.eq.s32.totalorder %s22, 1
      %p103 = por %p101, %p102
      %p104 = scmp.ne.s32.totalorder %s95, %s96
      %p105 = scmp.eq.s32.totalorder %s22, 0
      %p106 = por %p104, %p105
      %p107 = scmp.ne.s32.totalorder %s95, %s96
      %p108 = scmp.eq.s32.totalorder %s23, 1
      %p109 = por %p107, %p108
      %p111 = scmp.ne.s32.totalorder %s96, %s110
      %p112 = scmp.eq.s32.totalorder %s23, 0
      %p113 = por %p111, %p112
      %s115 = sadd.s32 %s114, 1
      %p118 = scmp.eq.s32.totalorder %s17, 1
      %p119 = scmp.ne.s32.totalorder %s114, %s116
      %p120 = scmp.eq.s32.totalorder %s17, 0
      %p121 = por %p119, %p120
      %p122 = scmp.ne.s32.totalorder %s114, %s116
      %p123 = scmp.eq.s32.totalorder %s22, 1
      %p124 = por %p122, %p123
      %p125 = scmp.ne.s32.totalorder %s116, %s117
      %p126 = scmp.eq.s32.totalorder %s22, 0
      %p127 = por %p125, %p126
      %p128 = scmp.ne.s32.totalorder %s116, %s117
      %p129 = scmp.eq.s32.totalorder %s23, 1
      %p130 = por %p128, %p129
      %p132 = scmp.ne.s32.totalorder %s117, %s131
      %p133 = scmp.eq.s32.totalorder %s23, 0
      %p134 = por %p132, %p133
      %s136 = sadd.s32 %s135, 1
      %p139 = scmp.eq.s32.totalorder %s17, 1
      %p140 = scmp.ne.s32.totalorder %s135, %s137
      %p141 = scmp.eq.s32.totalorder %s17, 0
      %p142 = por %p140, %p141
      %p143 = scmp.ne.s32.totalorder %s135, %s137
      %p144 = scmp.eq.s32.totalorder %s22, 1
      %p145 = por %p143, %p144
      %p146 = scmp.ne.s32.totalorder %s137, %s138
      %p147 = scmp.eq.s32.totalorder %s22, 0
      %p148 = por %p146, %p147
      %p149 = scmp.ne.s32.totalorder %s137, %s138
      %p150 = scmp.eq.s32.totalorder %s23, 1
      %p151 = por %p149, %p150
      %p153 = scmp.ne.s32.totalorder %s138, %s152
      %p154 = scmp.eq.s32.totalorder %s23, 0
      %p155 = por %p153, %p154
      %s156 = ssub.s32 %s17, %s24
      %p157 = scmp.eq.s32.totalorder %s156, 0
      %s159 = sadd.s32 %s158, 1
      %s160 = scalar_select %p157, %s158, %s159
      %p163 = pneg %p157
      %p164 = scmp.eq.s32.totalorder %s17, 1
      %p165 = por %p163, %p164
      %p166 = scmp.ne.s32.totalorder %s158, %s161
      %p167 = scmp.eq.s32.totalorder %s17, 0
      %p168 = por %p166, %p167
      %p169 = scmp.ne.s32.totalorder %s158, %s161
      %p170 = scmp.eq.s32.totalorder %s22, 1
      %p171 = por %p169, %p170
      %p172 = scmp.ne.s32.totalorder %s161, %s162
      %p173 = scmp.eq.s32.totalorder %s22, 0
      %p174 = por %p172, %p173
      %p175 = scmp.ne.s32.totalorder %s161, %s162
      %p176 = scmp.eq.s32.totalorder %s23, 1
      %p177 = por %p175, %p176
      %p179 = scmp.ne.s32.totalorder %s162, %s178
      %p180 = scmp.eq.s32.totalorder %s23, 0
      %p181 = por %p179, %p180
      %p182 = scmp.le.s32.totalorder 1, %s17
      %p183 = scmp.lt.s32.totalorder %s17, 3
      %p184 = pnand %p182, %p183
      %p185 = pneg %p184
      // Predicated region
      $region9: #{tpu_custom_call.1} parent=5 // pred_check
        _
      $region10: #{tpu_custom_call.1} parent=5 // pred_check_branch
        %187 = sbr.rel (%p184) target = $region12
      $region11: #{tpu_custom_call.1} parent=5 // pred_region
        %s188 = ssub.s32 %s17, 1
        // Predicated region
        $region13: #{tpu_custom_call.1} parent=11 // pred_check
          %p189 = pneg %p64
        $region14: #{tpu_custom_call.1} parent=11 // pred_check_branch
          %191 = sbr.rel (%p189) target = $region16
        $region15: #{tpu_custom_call.1} parent=11 // pred_region
          _
        $region16: #{tpu_custom_call.1} parent=11 // pred_fallthru
          _
        // Predicated region
        $region17: #{tpu_custom_call.1} parent=11 // pred_check
          %p192 = pneg %p85
        $region18: #{tpu_custom_call.1} parent=11 // pred_check_branch
          %194 = sbr.rel (%p192) target = $region20
        $region19: #{tpu_custom_call.1} parent=11 // pred_region
          _
        $region20: #{tpu_custom_call.1} parent=11 // pred_fallthru
          _
        // Predicated region
        $region21: #{tpu_custom_call.1} parent=11 // pred_check
          %p195 = pneg %p106
        $region22: #{tpu_custom_call.1} parent=11 // pred_check_branch
          %197 = sbr.rel (%p195) target = $region24
        $region23: #{tpu_custom_call.1} parent=11 // pred_region
          %s199 = ssub.s32 1024, 1024
          %200 = vsyncadd [#allocation3], %s199
          %s201 = sshll.u32 [#allocation2], 4
          %s202 = int_to_ptr.vmem [resolvable:$true] %s201
          %207 = dma.hbm_to_vmem [thread:$0]  %s3, 1024, %s202, [#allocation3], 64, 64, 4
        $region24: #{tpu_custom_call.1} parent=11 // pred_fallthru
          _
        // Predicated region
        $region25: #{tpu_custom_call.1} parent=11 // pred_check
          %p208 = pneg %p127
        $region26: #{tpu_custom_call.1} parent=11 // pred_check_branch
          %210 = sbr.rel (%p208) target = $region28
        $region27: #{tpu_custom_call.1} parent=11 // pred_region
          _
        $region28: #{tpu_custom_call.1} parent=11 // pred_fallthru
          _
        // Predicated region
        $region29: #{tpu_custom_call.1} parent=11 // pred_check
          %p211 = pneg %p148
        $region30: #{tpu_custom_call.1} parent=11 // pred_check_branch
          %213 = sbr.rel (%p211) target = $region32
        $region31: #{tpu_custom_call.1} parent=11 // pred_region
          %s215 = ssub.s32 1024, 1024
          %216 = vsyncadd [#allocation6], %s215
          %s217 = sshll.u32 [#allocation5], 4
          %s218 = int_to_ptr.vmem [resolvable:$true] %s217
          %223 = dma.hbm_to_vmem [thread:$0]  %s5, 1024, %s218, [#allocation6], 64, 64, 4
        $region32: #{tpu_custom_call.1} parent=11 // pred_fallthru
          _
      $region12: #{tpu_custom_call.1} parent=5 // pred_fallthru
        _
      %p224 = scmp.lt.s32.totalorder %s17, 2
      // Predicated region
      $region33: #{tpu_custom_call.1} parent=5 // pred_check
        %p225 = pneg %p224
      $region34: #{tpu_custom_call.1} parent=5 // pred_check_branch
        %227 = sbr.rel (%p225) target = $region36
      $region35: #{tpu_custom_call.1} parent=5 // pred_region
        // Predicated region
        $region37: #{tpu_custom_call.1} parent=35 // pred_check
          %p228 = pneg %p37
        $region38: #{tpu_custom_call.1} parent=35 // pred_check_branch
          %230 = sbr.rel (%p228) target = $region40
        $region39: #{tpu_custom_call.1} parent=35 // pred_region
          %s231 = smul.u32 4, %s17
          %p232 = scmp.lt.s32.totalorder %s231, 7
          %s233 = scalar_select %p232, %s231, 7
          %s234 = smul.addr %s233, 4
          %s235 = scalar_lea.vmem %s0, %s234
          %s236 = smul.u32 4, %s17
        $region40: #{tpu_custom_call.1} parent=35 // pred_fallthru
          _
      $region36: #{tpu_custom_call.1} parent=5 // pred_fallthru
        _
      %p237 = scmp.le.s32.totalorder 1, %s17
      %p238 = scmp.lt.s32.totalorder %s17, 3
      %p239 = pnand %p237, %p238
      %p240 = pneg %p239
      // Predicated region
      $region41: #{tpu_custom_call.1} parent=5 // pred_check
        _
      $region42: #{tpu_custom_call.1} parent=5 // pred_check_branch
        %242 = sbr.rel (%p239) target = $region44
      $region43: #{tpu_custom_call.1} parent=5 // pred_region
        %s243 = ssub.s32 %s17, 1
        // Predicated region
        $region45: #{tpu_custom_call.1} parent=43 // pred_check
          %p244 = pneg %p106
        $region46: #{tpu_custom_call.1} parent=43 // pred_check_branch
          %246 = sbr.rel (%p244) target = $region48
        $region47: #{tpu_custom_call.1} parent=43 // pred_region
          %247 = dma.done [#allocation3], 1024
        $region48: #{tpu_custom_call.1} parent=43 // pred_fallthru
          _
        // Predicated region
        $region49: #{tpu_custom_call.1} parent=43 // pred_check
          %p248 = pneg %p148
        $region50: #{tpu_custom_call.1} parent=43 // pred_check_branch
          %250 = sbr.rel (%p248) target = $region52
        $region51: #{tpu_custom_call.1} parent=43 // pred_region
          %251 = dma.done [#allocation6], 1024
        $region52: #{tpu_custom_call.1} parent=43 // pred_fallthru
          _
        %s252 = smul.u32 4, %s22
        %p253 = scmp.lt.s32.totalorder %s252, 7
        %s254 = scalar_select %p253, %s252, 7
        %s255 = smul.addr %s254, 4
        %s256 = scalar_lea.vmem %s0, %s255
        %p257 = pneg %p43
        %p258 = pneg %p40
        %p259 = pneg %p64
        %p260 = pneg %p61
        %p261 = pneg %p85
        %p262 = pneg %p82
        %p263 = pneg %p106
        %p264 = pneg %p103
        %p265 = pneg %p127
        %p266 = pneg %p124
        %p267 = pneg %p148
        %p268 = pneg %p145
        %p269 = pneg %p174
        %p270 = pneg %p171
        %s271 = sand.u32 %s161, 1
        %s272 = scalar_lea.sflag [#allocation4], %s271
        %s273 = sand.u32 %s161, 1
        %s274 = smul.addr %s273, 32
        %s275 = scalar_lea.vmem [#allocation7], %s274
        %s276 = smul.u32 4, %s22
        %p277 = scmp.lt.s32.totalorder %s276, 7
        %s278 = scalar_select %p277, %s276, 7
        %s279 = smul.addr %s278, 4
        %s280 = scalar_lea.vmem %s0, %s279
        %s281 = smul.u32 4, %s22
        %s282 = smul.u32 4, %s22
        %v284 = vld [vmem:[%s280] sm:$0xf]
        %v285 = vld [vmem:[%s280 + $0x4] sm:$0xf]
        %v286 = vld [vmem:[%s280 + $0x8] sm:$0xf]
        %v287 = vld [vmem:[%s280 + $0xc] sm:$0xf]
        %v288 = vld [vmem:[%s1] sm:$0x3]
        %v289 = vld [vmem:[%s2] sm:$0x1]
        %v291 = vlaneseq
        %v292 = vshrl.u32 %v291, 7
        %v293 = vsub.s32 0, %v292
        %v294 = vrot.slane %v289, %v293
        %v300 = vunpack.c.l.b16 %v284
        %v301 = vunpack.c.l.b16 %v285
        %v302 = vunpack.c.l.b16 %v286
        %v303 = vunpack.c.l.b16 %v287
        %v304 = vpack.c.b16 %v301, %v300
        %v305 = vpack.c.b16 %v303, %v302
        %vm306 = vcmask 31744
        %v308 = vsel %vm306, %v304, 0
        %v311 = vsel %vm306, %v305, 0
        %vm313 = vcmask 1041408
        %v315 = vsel %vm313, %v288, 0
        %317 = vmatprep.subr.bf16.mxu0 0
        %318 = vmatpush1.bf16.msra.mxu0 0
        %319 = vmatprep.subr.bf16.mxu0 0
        %320 = vmatpush1.bf16.msra.mxu0 0
        %321 = vmatprep.subr.bf16.mxu0 0
        %322 = vmatpush1.bf16.msra.mxu0 0
        %323 = vmatprep.subr.bf16.mxu0 0
        %324 = vmatpush1.bf16.msra.mxu0 0
        %325 = vmatprep.subr.bf16.mxu0 0
        %326 = vmatpush1.bf16.msra.mxu0 0
        %327 = vmatprep.subr.bf16.mxu0 0
        %328 = vmatpush1.bf16.msra.mxu0 0
        %329 = vmatprep.subr.bf16.mxu0 0
        %330 = vmatpush1.bf16.msra.mxu0 0
        %331 = vmatprep.subr.bf16.mxu0 0
        %332 = vmatpush1.bf16.msra.mxu0 %v315
        %333 = vmatprep.subr.bf16.mxu0 0
        %334 = vmatpush2.bf16.msra.mxu0 0
        %335 = vmatprep.subr.bf16.mxu0 0
        %336 = vmatpush2.bf16.msra.mxu0 0
        %337 = vmatprep.subr.bf16.mxu0 0
        %338 = vmatpush2.bf16.msra.mxu0 0
        %339 = vmatprep.subr.bf16.mxu0 0
        %340 = vmatpush2.bf16.msra.mxu0 0
        %341 = vmatprep.subr.bf16.mxu0 0
        %342 = vmatpush2.bf16.msra.mxu0 0
        %343 = vmatprep.subr.bf16.mxu0 0
        %344 = vmatpush2.bf16.msra.mxu0 0
        %345 = vmatprep.subr.bf16.mxu0 0
        %346 = vmatpush2.bf16.msra.mxu0 0
        %347 = vmatprep.subr.bf16.mxu0 0
        %348 = vmatpush2.bf16.msra.mxu0 0
        %349 = vmatprep.mubr.bf16.mxu0 0
        %350 = vmatmul.mubr.bf16.gmra.mxu0 %v308
        %v351 = vpop.f32.mrf.mxu0
        %v352 = vadd.f32 %v294, %v351
        %v353 = vpop.f32.mrf.mxu0
        %v354 = vpop.f32.mrf.mxu0
        %v355 = vadd.f32 %v294, %v354
        %v356 = vpop.f32.mrf.mxu0
        %357 = vmatprep.mubr.bf16.mxu0 0
        %358 = vmatmul.mubr.bf16.gmra.mxu0 %v311
        %v359 = vpop.f32.mrf.mxu0
        %v360 = vadd.f32 %v294, %v359
        %v361 = vpop.f32.mrf.mxu0
        %v362 = vpop.f32.mrf.mxu0
        %v363 = vadd.f32 %v294, %v362
        %v364 = vpop.f32.mrf.mxu0
        %365 = vdwg.mxu0
        %v366 = vtanh.pop %v352
        %v367 = vtanh.pop %v355
        %v368 = vtanh.pop %v360
        %v369 = vtanh.pop %v363
        %v370 = vpack.c.bf16 %v367, %v366
        %v371 = vpack.c.bf16 %v369, %v368
        %v372 = vld [vmem:[#allocation2] sm:$0xf]
        %v373 = vld [vmem:[#allocation2 + $0x4] sm:$0xf]
        %v374 = vld [vmem:[#allocation2 + $0x8] sm:$0xf]
        %v375 = vld [vmem:[#allocation2 + $0xc] sm:$0xf]
        %v376 = vld [vmem:[#allocation2 + $0x10] sm:$0xf]
        %v377 = vld [vmem:[#allocation2 + $0x14] sm:$0xf]
        %v378 = vld [vmem:[#allocation2 + $0x18] sm:$0xf]
        %v379 = vld [vmem:[#allocation2 + $0x1c] sm:$0xf]
        %v380 = vld [vmem:[#allocation2 + $0x20] sm:$0xf]
        %v381 = vld [vmem:[#allocation2 + $0x24] sm:$0xf]
        %v382 = vld [vmem:[#allocation2 + $0x28] sm:$0xf]
        %v383 = vld [vmem:[#allocation2 + $0x2c] sm:$0xf]
        %v384 = vld [vmem:[#allocation2 + $0x30] sm:$0xf]
        %v385 = vld [vmem:[#allocation2 + $0x34] sm:$0xf]
        %v386 = vld [vmem:[#allocation2 + $0x38] sm:$0xf]
        %v387 = vld [vmem:[#allocation2 + $0x3c] sm:$0xf]
        %v388 = vld [vmem:[%s4] sm:$0x1]
        %v390 = vlaneseq
        %v391 = vshrl.u32 %v390, 7
        %v392 = vsub.s32 0, %v391
        %v393 = vrot.slane %v388, %v392
        %v411 = vunpack.c.l.b16 %v372
        %v412 = vunpack.c.l.b16 %v373
        %v413 = vunpack.c.l.b16 %v374
        %v414 = vunpack.c.l.b16 %v375
        %v415 = vunpack.c.l.b16 %v376
        %v416 = vunpack.c.l.b16 %v377
        %v417 = vunpack.c.l.b16 %v378
        %v418 = vunpack.c.l.b16 %v379
        %v419 = vunpack.c.l.b16 %v380
        %v420 = vunpack.c.l.b16 %v381
        %v421 = vunpack.c.l.b16 %v382
        %v422 = vunpack.c.l.b16 %v383
        %v423 = vunpack.c.l.b16 %v384
        %v424 = vunpack.c.l.b16 %v385
        %v425 = vunpack.c.l.b16 %v386
        %v426 = vunpack.c.l.b16 %v387
        %v427 = vpack.c.b16 %v412, %v411
        %v428 = vpack.c.b16 %v414, %v413
        %v429 = vpack.c.b16 %v416, %v415
        %v430 = vpack.c.b16 %v418, %v417
        %v431 = vpack.c.b16 %v420, %v419
        %v432 = vpack.c.b16 %v422, %v421
        %v433 = vpack.c.b16 %v424, %v423
        %v434 = vpack.c.b16 %v426, %v425
        %443 = vmatprep.subr.bf16.mxu0 0
        %444 = vmatpush1.bf16.msra.mxu0 %v434
        %445 = vmatprep.subr.bf16.mxu0 0
        %446 = vmatpush1.bf16.msra.mxu0 %v433
        %447 = vmatprep.subr.bf16.mxu0 0
        %448 = vmatpush1.bf16.msra.mxu0 %v432
        %449 = vmatprep.subr.bf16.mxu0 0
        %450 = vmatpush1.bf16.msra.mxu0 %v431
        %451 = vmatprep.subr.bf16.mxu0 0
        %452 = vmatpush1.bf16.msra.mxu0 %v430
        %453 = vmatprep.subr.bf16.mxu0 0
        %454 = vmatpush1.bf16.msra.mxu0 %v429
        %455 = vmatprep.subr.bf16.mxu0 0
        %456 = vmatpush1.bf16.msra.mxu0 %v428
        %457 = vmatprep.subr.bf16.mxu0 0
        %458 = vmatpush1.bf16.msra.mxu0 %v427
        %459 = vmatprep.subr.bf16.mxu0 0
        %460 = vmatpush2.bf16.msra.mxu0 0
        %461 = vmatprep.subr.bf16.mxu0 0
        %462 = vmatpush2.bf16.msra.mxu0 0
        %463 = vmatprep.subr.bf16.mxu0 0
        %464 = vmatpush2.bf16.msra.mxu0 0
        %465 = vmatprep.subr.bf16.mxu0 0
        %466 = vmatpush2.bf16.msra.mxu0 0
        %467 = vmatprep.subr.bf16.mxu0 0
        %468 = vmatpush2.bf16.msra.mxu0 0
        %469 = vmatprep.subr.bf16.mxu0 0
        %470 = vmatpush2.bf16.msra.mxu0 0
        %471 = vmatprep.subr.bf16.mxu0 0
        %472 = vmatpush2.bf16.msra.mxu0 0
        %473 = vmatprep.subr.bf16.mxu0 0
        %474 = vmatpush2.bf16.msra.mxu0 0
        %475 = vmatprep.mubr.bf16.mxu0 0
        %476 = vmatmul.mubr.bf16.gmra.mxu0 %v370
        %v477 = vpop.f32.mrf.mxu0
        %v478 = vadd.f32 %v393, %v477
        %v479 = vpop.f32.mrf.mxu0
        %v480 = vpop.f32.mrf.mxu0
        %v481 = vadd.f32 %v393, %v480
        %v482 = vpop.f32.mrf.mxu0
        %483 = vmatprep.mubr.bf16.mxu0 0
        %484 = vmatmul.mubr.bf16.gmra.mxu0 %v371
        %v485 = vpop.f32.mrf.mxu0
        %v486 = vadd.f32 %v393, %v485
        %v487 = vpop.f32.mrf.mxu0
        %v488 = vpop.f32.mrf.mxu0
        %v489 = vadd.f32 %v393, %v488
        %v490 = vpop.f32.mrf.mxu0
        %491 = vdwg.mxu0
        %v492 = vtanh.pop %v478
        %v493 = vtanh.pop %v481
        %v494 = vtanh.pop %v486
        %v495 = vtanh.pop %v489
        %v496 = vpack.c.bf16 %v493, %v492
        %v497 = vpack.c.bf16 %v495, %v494
        %v498 = vld [vmem:[#allocation5] sm:$0xf]
        %v499 = vld [vmem:[#allocation5 + $0x4] sm:$0xf]
        %v500 = vld [vmem:[#allocation5 + $0x8] sm:$0xf]
        %v501 = vld [vmem:[#allocation5 + $0xc] sm:$0xf]
        %v502 = vld [vmem:[#allocation5 + $0x10] sm:$0xf]
        %v503 = vld [vmem:[#allocation5 + $0x14] sm:$0xf]
        %v504 = vld [vmem:[#allocation5 + $0x18] sm:$0xf]
        %v505 = vld [vmem:[#allocation5 + $0x1c] sm:$0xf]
        %v506 = vld [vmem:[#allocation5 + $0x20] sm:$0xf]
        %v507 = vld [vmem:[#allocation5 + $0x24] sm:$0xf]
        %v508 = vld [vmem:[#allocation5 + $0x28] sm:$0xf]
        %v509 = vld [vmem:[#allocation5 + $0x2c] sm:$0xf]
        %v510 = vld [vmem:[#allocation5 + $0x30] sm:$0xf]
        %v511 = vld [vmem:[#allocation5 + $0x34] sm:$0xf]
        %v512 = vld [vmem:[#allocation5 + $0x38] sm:$0xf]
        %v513 = vld [vmem:[#allocation5 + $0x3c] sm:$0xf]
        %v530 = vunpack.c.l.b16 %v498
        %v531 = vunpack.c.l.b16 %v499
        %v532 = vunpack.c.l.b16 %v500
        %v533 = vunpack.c.l.b16 %v501
        %v534 = vunpack.c.l.b16 %v502
        %v535 = vunpack.c.l.b16 %v503
        %v536 = vunpack.c.l.b16 %v504
        %v537 = vunpack.c.l.b16 %v505
        %v538 = vunpack.c.l.b16 %v506
        %v539 = vunpack.c.l.b16 %v507
        %v540 = vunpack.c.l.b16 %v508
        %v541 = vunpack.c.l.b16 %v509
        %v542 = vunpack.c.l.b16 %v510
        %v543 = vunpack.c.l.b16 %v511
        %v544 = vunpack.c.l.b16 %v512
        %v545 = vunpack.c.l.b16 %v513
        %v546 = vpack.c.b16 %v531, %v530
        %v547 = vpack.c.b16 %v533, %v532
        %v548 = vpack.c.b16 %v535, %v534
        %v549 = vpack.c.b16 %v537, %v536
        %v550 = vpack.c.b16 %v539, %v538
        %v551 = vpack.c.b16 %v541, %v540
        %v552 = vpack.c.b16 %v543, %v542
        %v553 = vpack.c.b16 %v545, %v544
        %562 = vmatprep.subr.bf16.mxu0 0
        %563 = vmatpush1.bf16.msra.mxu0 %v553
        %564 = vmatprep.subr.bf16.mxu0 0
        %565 = vmatpush1.bf16.msra.mxu0 %v552
        %566 = vmatprep.subr.bf16.mxu0 0
        %567 = vmatpush1.bf16.msra.mxu0 %v551
        %568 = vmatprep.subr.bf16.mxu0 0
        %569 = vmatpush1.bf16.msra.mxu0 %v550
        %570 = vmatprep.subr.bf16.mxu0 0
        %571 = vmatpush1.bf16.msra.mxu0 %v549
        %572 = vmatprep.subr.bf16.mxu0 0
        %573 = vmatpush1.bf16.msra.mxu0 %v548
        %574 = vmatprep.subr.bf16.mxu0 0
        %575 = vmatpush1.bf16.msra.mxu0 %v547
        %576 = vmatprep.subr.bf16.mxu0 0
        %577 = vmatpush1.bf16.msra.mxu0 %v546
        %578 = vmatprep.subr.bf16.mxu0 0
        %579 = vmatpush2.bf16.msra.mxu0 0
        %580 = vmatprep.subr.bf16.mxu0 0
        %581 = vmatpush2.bf16.msra.mxu0 0
        %582 = vmatprep.subr.bf16.mxu0 0
        %583 = vmatpush2.bf16.msra.mxu0 0
        %584 = vmatprep.subr.bf16.mxu0 0
        %585 = vmatpush2.bf16.msra.mxu0 0
        %586 = vmatprep.subr.bf16.mxu0 0
        %587 = vmatpush2.bf16.msra.mxu0 0
        %588 = vmatprep.subr.bf16.mxu0 0
        %589 = vmatpush2.bf16.msra.mxu0 0
        %590 = vmatprep.subr.bf16.mxu0 0
        %591 = vmatpush2.bf16.msra.mxu0 0
        %592 = vmatprep.subr.bf16.mxu0 0
        %593 = vmatpush2.bf16.msra.mxu0 0
        %594 = vmatprep.mubr.bf16.mxu0 0
        %595 = vmatmul.mubr.bf16.gmra.mxu0 %v496
        %v596 = vpop.f32.mrf.mxu0
        %v597 = vadd.f32 0.0, %v596
        %v598 = vpop.f32.mrf.mxu0
        %v599 = vpop.f32.mrf.mxu0
        %v600 = vadd.f32 0.0, %v599
        %v601 = vpop.f32.mrf.mxu0
        %602 = vmatprep.mubr.bf16.mxu0 0
        %603 = vmatmul.mubr.bf16.gmra.mxu0 %v497
        %v604 = vpop.f32.mrf.mxu0
        %v605 = vadd.f32 0.0, %v604
        %v606 = vpop.f32.mrf.mxu0
        %v607 = vpop.f32.mrf.mxu0
        %v608 = vadd.f32 0.0, %v607
        %v609 = vpop.f32.mrf.mxu0
        %610 = vdwg.mxu0
        %611 = vst [vmem:[%s275] sm:$0xff] %v597
        %612 = vst [vmem:[%s275 + $0x8] sm:$0xff] %v600
        %613 = vst [vmem:[%s275 + $0x10] sm:$0xff] %v605
        %614 = vst [vmem:[%s275 + $0x18] sm:$0xff] %v608
        %s615 = sand.u32 %s161, 1
        %s616 = scalar_lea.sflag [#allocation4], %s615
        %s617 = sand.u32 %s161, 1
        %s618 = smul.addr %s617, 32
        %s619 = scalar_lea.vmem [#allocation7], %s618
        // Predicated region
        $region53: #{tpu_custom_call.1} parent=43 // pred_check
          %p620 = pneg %p171
        $region54: #{tpu_custom_call.1} parent=43 // pred_check_branch
          %622 = sbr.rel (%p620) target = $region56
        $region55: #{tpu_custom_call.1} parent=43 // pred_region
          %s623 = smul.u32 4, %s22
          %s625 = ssub.s32 512, 512
          %626 = vsyncadd %s616, %s625
          %s627 = smul.addr %s623, 128
          %s628 = scalar_lea.hbm %s6, %s627
          %s629 = sshll.u32 %s619, 4
          %s630 = int_to_ptr.vmem [resolvable:$true] %s629
          %635 = dma.vmem_to_hbm [thread:$0]  %s630, 512, %s628, %s616, 128, 128, 8
        $region56: #{tpu_custom_call.1} parent=43 // pred_fallthru
          _
      $region44: #{tpu_custom_call.1} parent=5 // pred_fallthru
        _
      %p636 = scmp.le.s32.totalorder 2, %s17
      // Predicated region
      $region57: #{tpu_custom_call.1} parent=5 // pred_check
        %p637 = pneg %p636
      $region58: #{tpu_custom_call.1} parent=5 // pred_check_branch
        %639 = sbr.rel (%p637) target = $region60
      $region59: #{tpu_custom_call.1} parent=5 // pred_region
        %s640 = ssub.s32 %s17, 2
        // Predicated region
        $region61: #{tpu_custom_call.1} parent=59 // pred_check
          %p641 = pneg %p177
        $region62: #{tpu_custom_call.1} parent=59 // pred_check_branch
          %643 = sbr.rel (%p641) target = $region64
        $region63: #{tpu_custom_call.1} parent=59 // pred_region
          %s644 = sand.u32 %s162, 1
          %s645 = scalar_lea.sflag [#allocation4], %s644
          %s646 = sand.u32 %s162, 1
          %s647 = smul.addr %s646, 32
          %s648 = scalar_lea.vmem [#allocation7], %s647
          %649 = dma.done %s645, 512
        $region64: #{tpu_custom_call.1} parent=59 // pred_fallthru
          _
      $region60: #{tpu_custom_call.1} parent=5 // pred_fallthru
        _
    $region6: #{tpu_custom_call.1} parent=1 // loop_footer
      %s21 = sadd.s32 1, %s17
    $region7: #{tpu_custom_call.1} parent=1 // loop_footer_branch
      %16 = sbr.rel target = $region3
    $region8: #{tpu_custom_call.1} parent=1 // loop_exit
      _
    %650 = vsyncpa [#allocation3], 1
    %s651 = scalar_lea.sflag [#allocation3], 1
    %652 = vsyncpa %s651, 1
    %653 = vsyncpa [#allocation6], 1
    %654 = vsyncpa [#allocation4], 1
    %s655 = scalar_lea.sflag [#allocation4], 1
    %656 = vsyncpa %s655, 1

</llo_original>
